<compile_context>
chip_gen: v5e
topology: v5e:2x2
jax: 0.10.0
libtpu: 0.0.40
codegen_flags: <defaults>
</compile_context>

<pallas_src>
import functools

import numpy as np
import jax
import jax.numpy as jnp
from jax.experimental import pallas as pl
from jax.experimental.pallas import tpu as pltpu


def _round_up(x, m):
    return (x + m - 1) // m * m


# --------------------------------------------------------------- kernel 1 ---
def _conv_stats_kernel(a_ref, w_ref, stat_ref):
    """Stats-only pass for one M-tile.

    a_ref   : (TM, KCP)    bf16  im2col slab tile
    w_ref   : (KCP, C4P)   bf16  phase-packed weight (same block every step)
    stat_ref: (1, 2, C4P)  f32   per-tile [column sum ; column sum of squares]

    The matmul result is NOT written back; only the BN partial sums (computed
    from the f32 MXU accumulator, before any downcast) leave the kernel.
    """
    y = jnp.dot(a_ref[...], w_ref[...], preferred_element_type=jnp.float32)
    s1 = jnp.sum(y, axis=0, keepdims=True)        # (1, C4P)
    s2 = jnp.sum(y * y, axis=0, keepdims=True)    # (1, C4P) single-pass stats
    stat_ref[0] = jnp.concatenate([s1, s2], axis=0)


# --------------------------------------------------------------- kernel 2 ---
def _conv_affine_act_kernel(a_ref, w_ref, scale_ref, shift_ref, o_ref, *, activ):
    """Fused pass: recompute conv matmul, BN affine, activation, one store."""
    y = jnp.dot(a_ref[...], w_ref[...], preferred_element_type=jnp.float32)
    z = y * scale_ref[...] + shift_ref[...]
    if activ == 'relu':
        z = jnp.maximum(z, 0.0)
    elif activ == 'tanh':
        z = jnp.tanh(z)
    o_ref[...] = z


# ----------------------------------------------------------------- wrapper ---
@functools.partial(jax.jit, static_argnames=("activ", "batchnorm"))
def fractionally_strided_conv_block(x_nchw, weight, gamma, beta,
                                    activ='relu', batchnorm=True):
    """x_nchw: (N, Cin, H, W) f32; weight: (Cin, Cout, 5, 5) (ConvTranspose2d
    layout); gamma/beta: (Cout,). Returns (N, Cout, 2H, 2W) f32."""
    EPS = 1e-5
    N, Cin, H, W = x_nchw.shape
    Cout = weight.shape[1]
    Ho, Wo = 2 * H, 2 * W                    # (H-1)*2 - 2*2 + 5 + 1 = 2H

    M = N * H * W                            # flat "input pixel" axis
    TM = min(1024, _round_up(M, 256))        # big M tile; tight for small M
    MP = _round_up(M, TM)
    n_tiles = MP // TM

    KC = 9 * Cin                             # 3x3 tap window * Cin
    KCP = _round_up(KC, 64)                  # aligned contraction depth
    C4 = 4 * Cout                            # 4 sub-pixel phases stacked on lanes
    C4P = _round_up(C4, 128)                 # ONE pad-to-128 after phase packing

    # ---- wrapper glue (plain JAX): im2col slab and phase-packed weight ----
    x = jnp.transpose(x_nchw, (0, 2, 3, 1)).astype(jnp.float32)          # NHWC
    xpad = jnp.pad(x, ((0, 0), (1, 1), (1, 1), (0, 0)))                  # (N,H+2,W+2,Cin)
    cols = [xpad[:, a:a + H, b:b + W, :] for a in range(3) for b in range(3)]
    slab = jnp.concatenate(cols, axis=-1).reshape(M, KC)                 # (M, 9*Cin)
    slab = jnp.pad(slab, ((0, MP - M), (0, KCP - KC))).astype(jnp.bfloat16)

    # HWIO, spatially flipped: wflip[kh,kw,ci,co] = weight[ci,co,4-kh,4-kw]
    wflip = jnp.transpose(weight, (2, 3, 0, 1))[::-1, ::-1, :, :].astype(jnp.float32)

    # sub-kernel of phase (ph, pw), embedded in the shared 3x3 tap window
    def _phase(ph, pw):
        sub = wflip[ph::2, pw::2]                                        # (3-ph,3-pw,Cin,Cout)
        return jnp.pad(sub, ((ph, 0), (pw, 0), (0, 0), (0, 0)))          # -> (3,3,Cin,Cout)

    wph = jnp.stack([_phase(0, 0), _phase(0, 1), _phase(1, 0), _phase(1, 1)],
                    axis=-2)                                             # (3,3,Cin,4,Cout)
    w_mat = wph.reshape(KC, C4)                                          # lane = ph_idx*Cout+co
    w_mat = jnp.pad(w_mat, ((0, KCP - KC), (0, C4P - C4))).astype(jnp.bfloat16)

    cparams = pltpu.CompilerParams(
        dimension_semantics=("parallel",),        # M axis shards across v7x TCs
        vmem_limit_bytes=64 * 1024 * 1024)

    # ---- kernel 1: BN partial sums only (no conv writeback) ----
    if batchnorm:
        stats = pl.pallas_call(
            _conv_stats_kernel,
            out_shape=jax.ShapeDtypeStruct((n_tiles, 2, C4P), jnp.float32),
            grid=(n_tiles,),
            in_specs=[pl.BlockSpec((TM, KCP), lambda i: (i, 0)),
                      pl.BlockSpec((KCP, C4P), lambda i: (0, 0))],
            out_specs=pl.BlockSpec((1, 2, C4P), lambda i: (i, 0, 0)),
            compiler_params=cparams,
        )(slab, w_mat)

        # tiny O(Cout) fold of partial stats -> per-channel scale / shift
        count = float(N * Ho * Wo)                                       # = 4*M
        col = jnp.sum(stats, axis=0)                                     # (2, C4P)
        col_sum = col[0, :C4].reshape(4, Cout).sum(0)
        col_sq = col[1, :C4].reshape(4, Cout).sum(0)
        mean = col_sum / count
        var = jnp.maximum(col_sq / count - mean * mean, 0.0)             # biased (BN fwd)
        inv = jax.lax.rsqrt(var + EPS)
        scale_c = gamma.astype(jnp.float32) * inv
        shift_c = beta.astype(jnp.float32) - mean * scale_c
    else:
        scale_c = jnp.ones((Cout,), jnp.float32)
        shift_c = jnp.zeros((Cout,), jnp.float32)

    scale_col = jnp.pad(jnp.tile(scale_c, 4), (0, C4P - C4)).reshape(1, C4P)
    shift_col = jnp.pad(jnp.tile(shift_c, 4), (0, C4P - C4)).reshape(1, C4P)

    # ---- kernel 2: recompute matmul + fused BN affine + activation ----
    out_flat = pl.pallas_call(
        functools.partial(_conv_affine_act_kernel, activ=activ),
        out_shape=jax.ShapeDtypeStruct((MP, C4P), jnp.float32),
        grid=(n_tiles,),
        in_specs=[pl.BlockSpec((TM, KCP), lambda i: (i, 0)),
                  pl.BlockSpec((KCP, C4P), lambda i: (0, 0)),
                  pl.BlockSpec((1, C4P), lambda i: (0, 0)),
                  pl.BlockSpec((1, C4P), lambda i: (0, 0))],
        out_specs=pl.BlockSpec((TM, C4P), lambda i: (i, 0)),
        compiler_params=cparams,
    )(slab, w_mat, scale_col, shift_col)

    # ---- scatter the 4 sub-pixel phases back to NCHW (XLA fuses the slice) ----
    y = out_flat[:M, :C4].reshape(N, H, W, 2, 2, Cout)                   # (n,i,j,ph,pw,c)
    return jnp.transpose(y, (0, 5, 1, 3, 2, 4)).reshape(N, Cout, Ho, Wo)


# --------------------------------------------------------- numpy reference ---
def _reference(x, wt, gamma, beta, activ='relu', batchnorm=True, eps=1e-5):
    N, Cin, H, W = x.shape
    _, Cout, K, _ = wt.shape
    s, p, op = 2, 2, 1
    Ho = (H - 1) * s - 2 * p + K + op
    Wo = (W - 1) * s - 2 * p + K + op
    fh, fw = (H - 1) * s + K, (W - 1) * s + K
    yfull = np.zeros((N, Cout, fh, fw), np.float64)
    for ih in range(H):
        for iw in range(W):
            contrib = np.einsum('ni,iokl->nokl', x[:, :, ih, iw], wt)
            yfull[:, :, ih * s:ih * s + K, iw * s:iw * s + K] += contrib
    y = yfull[:, :, p:p + Ho, p:p + Wo]
    if batchnorm:
        mean = y.mean(axis=(0, 2, 3), keepdims=True)
        var = y.var(axis=(0, 2, 3), keepdims=True)   # biased, as in PyTorch fwd
        y = (y - mean) / np.sqrt(var + eps)
        y = y * gamma.reshape(1, -1, 1, 1) + beta.reshape(1, -1, 1, 1)
    if activ == 'relu':
        y = np.maximum(y, 0.0)
    elif activ == 'tanh':
        y = np.tanh(y)
    return y.astype(np.float32)


# -------------------------------------------------------------------- main ---
if __name__ == "__main__":
    in_channels, out_channels = 4, 8
    N, H, W = 2, 16, 16
    activ = 'relu'

    key = jax.random.PRNGKey(0)
    kx, kw = jax.random.split(key)
    x = jax.random.normal(kx, (N, in_channels, H, W), dtype=jnp.float32)
    # ConvTranspose2d weight layout: (in_channels, out_channels, kH, kW)
    bound = 1.0 / np.sqrt(in_channels * 5 * 5)
    weight = jax.random.uniform(kw, (in_channels, out_channels, 5, 5),
                                minval=-bound, maxval=bound, dtype=jnp.float32)
    gamma = jnp.ones((out_channels,), jnp.float32)   # BatchNorm2d default weight
    beta = jnp.zeros((out_channels,), jnp.float32)   # BatchNorm2d default bias

    out = fractionally_strided_conv_block(x, weight, gamma, beta,
                                          activ=activ, batchnorm=True)
    out = jax.block_until_ready(out)

    ref = _reference(np.asarray(x), np.asarray(weight),
                     np.asarray(gamma), np.asarray(beta), activ=activ)
    assert out.shape == (N, out_channels, 2 * H, 2 * W), out.shape
    # bf16 MXU operands with f32 accumulation -> tolerance set accordingly.
    np.testing.assert_allclose(np.asarray(out), ref, atol=2e-2, rtol=1e-2)

    print("KERNEL_OK")
</pallas_src>

<mosaic_0001>
module attributes {stable_mosaic.version = 11 : i64} {
  func.func @_conv_stats_kernel(%arg0: i32, %arg1: memref<512x64xbf16, #tpu.memory_space<vmem>>, %arg2: memref<64x128xbf16, #tpu.memory_space<vmem>>, %arg3: memref<1x2x128xf32, #tpu.memory_space<vmem>>) attributes {dimension_semantics = [#tpu.dimension_semantics<parallel>], iteration_bounds = array<i64: 1>, scalar_prefetch = 0 : i64, scratch_operands = 0 : i64, tpu.core_type = #tpu.core_type<tc>, window_params = [{transform_indices = @transform_0, window_bounds = array<i64: 512, 64>}, {pipeline_mode = #tpu.pipeline_mode<synchronous>, transform_indices = @transform_1, window_bounds = array<i64: 64, 128>}, {transform_indices = @transform_2, window_bounds = array<i64: 1, 2, 128>}]} {
    %c0 = arith.constant 0 : index
    %c0_0 = arith.constant 0 : index
    %0 = vector.load %arg1[%c0, %c0_0] : memref<512x64xbf16, #tpu.memory_space<vmem>>, vector<512x64xbf16>
    %c0_1 = arith.constant 0 : index
    %c0_2 = arith.constant 0 : index
    %1 = vector.load %arg2[%c0_1, %c0_2] : memref<64x128xbf16, #tpu.memory_space<vmem>>, vector<64x128xbf16>
    %cst = arith.constant dense<0.000000e+00> : vector<512x128xf32>
    %2 = tpu.matmul %0, %1, %cst {dimension_numbers = #tpu.dot_dimension_numbers<[1], [0], [0], [1], [0, 0, 1, 1], [], []>} : vector<512x64xbf16>, vector<64x128xbf16>, vector<512x128xf32> -> vector<512x128xf32>
    %cst_3 = arith.constant dense<0.000000e+00> : vector<128xf32>
    %3 = vector.multi_reduction <add>, %2, %cst_3 [0] : vector<512x128xf32> to vector<128xf32>
    %4 = vector.shape_cast %3 : vector<128xf32> to vector<1x128xf32>
    %5 = arith.mulf %2, %2 : vector<512x128xf32>
    %cst_4 = arith.constant dense<0.000000e+00> : vector<128xf32>
    %6 = vector.multi_reduction <add>, %5, %cst_4 [0] : vector<512x128xf32> to vector<128xf32>
    %7 = vector.shape_cast %6 : vector<128xf32> to vector<1x128xf32>
    %8 = tpu.concatenate %4, %7 in 0 : vector<1x128xf32>, vector<1x128xf32> -> vector<2x128xf32>
    %c0_5 = arith.constant 0 : index
    %c0_6 = arith.constant 0 : index
    %c0_7 = arith.constant 0 : index
    %9 = vector.load %arg3[%c0_5, %c0_6, %c0_7] : memref<1x2x128xf32, #tpu.memory_space<vmem>>, vector<1x2x128xf32>
    %10 = vector.shape_cast %9 : vector<1x2x128xf32> to vector<2x128xf32>
    %11 = vector.shape_cast %8 : vector<2x128xf32> to vector<1x2x128xf32>
    tpu.vector_store %arg3[%c0_5, %c0_6, %c0_7], %11 {strides = array<i32>} : memref<1x2x128xf32, #tpu.memory_space<vmem>>, vector<1x2x128xf32>,
    return
  }
  func.func @transform_0(%arg0: i32) -> (i32, i32) {
    %c0_i32 = arith.constant 0 : i32
    %c0_i32_0 = arith.constant 0 : i32
    return %arg0, %c0_i32 : i32, i32
  }
  func.func @transform_1(%arg0: i32) -> (i32, i32) {
    %c0_i32 = arith.constant 0 : i32
    %c0_i32_0 = arith.constant 0 : i32
    %c0_i32_1 = arith.constant 0 : i32
    return %c0_i32, %c0_i32_0 : i32, i32
  }
  func.func @transform_2(%arg0: i32) -> (i32, i32, i32) {
    %c0_i32 = arith.constant 0 : i32
    %c0_i32_0 = arith.constant 0 : i32
    %c0_i32_1 = arith.constant 0 : i32
    return %arg0, %c0_i32, %c0_i32_0 : i32, i32, i32
  }
}

module attributes {stable_mosaic.version = 11 : i64} {
  func.func @_conv_affine_act_kernel(%arg0: i32, %arg1: memref<512x64xbf16, #tpu.memory_space<vmem>>, %arg2: memref<64x128xbf16, #tpu.memory_space<vmem>>, %arg3: memref<1x128xf32, #tpu.memory_space<vmem>>, %arg4: memref<1x128xf32, #tpu.memory_space<vmem>>, %arg5: memref<512x128xf32, #tpu.memory_space<vmem>>) attributes {dimension_semantics = [#tpu.dimension_semantics<parallel>], iteration_bounds = array<i64: 1>, scalar_prefetch = 0 : i64, scratch_operands = 0 : i64, tpu.core_type = #tpu.core_type<tc>, window_params = [{transform_indices = @transform_0, window_bounds = array<i64: 512, 64>}, {pipeline_mode = #tpu.pipeline_mode<synchronous>, transform_indices = @transform_1, window_bounds = array<i64: 64, 128>}, {pipeline_mode = #tpu.pipeline_mode<synchronous>, transform_indices = @transform_2, window_bounds = array<i64: 1, 128>}, {pipeline_mode = #tpu.pipeline_mode<synchronous>, transform_indices = @transform_3, window_bounds = array<i64: 1, 128>}, {transform_indices = @transform_4, window_bounds = array<i64: 512, 128>}]} {
    %c0 = arith.constant 0 : index
    %c0_0 = arith.constant 0 : index
    %0 = vector.load %arg1[%c0, %c0_0] : memref<512x64xbf16, #tpu.memory_space<vmem>>, vector<512x64xbf16>
    %c0_1 = arith.constant 0 : index
    %c0_2 = arith.constant 0 : index
    %1 = vector.load %arg2[%c0_1, %c0_2] : memref<64x128xbf16, #tpu.memory_space<vmem>>, vector<64x128xbf16>
    %cst = arith.constant dense<0.000000e+00> : vector<512x128xf32>
    %2 = tpu.matmul %0, %1, %cst {dimension_numbers = #tpu.dot_dimension_numbers<[1], [0], [0], [1], [0, 0, 1, 1], [], []>} : vector<512x64xbf16>, vector<64x128xbf16>, vector<512x128xf32> -> vector<512x128xf32>
    %c0_3 = arith.constant 0 : index
    %c0_4 = arith.constant 0 : index
    %3 = vector.load %arg3[%c0_3, %c0_4] : memref<1x128xf32, #tpu.memory_space<vmem>>, vector<1x128xf32>
    %4 = vector.broadcast %3 : vector<1x128xf32> to vector<512x128xf32>
    %5 = arith.mulf %2, %4 : vector<512x128xf32>
    %c0_5 = arith.constant 0 : index
    %c0_6 = arith.constant 0 : index
    %6 = vector.load %arg4[%c0_5, %c0_6] : memref<1x128xf32, #tpu.memory_space<vmem>>, vector<1x128xf32>
    %7 = vector.broadcast %6 : vector<1x128xf32> to vector<512x128xf32>
    %8 = arith.addf %5, %7 : vector<512x128xf32>
    %cst_7 = arith.constant 0.000000e+00 : f32
    %9 = vector.broadcast %cst_7 : f32 to vector<512x128xf32>
    %10 = arith.maximumf %8, %9 : vector<512x128xf32>
    %c0_8 = arith.constant 0 : index
    %c0_9 = arith.constant 0 : index
    %11 = vector.load %arg5[%c0_8, %c0_9] : memref<512x128xf32, #tpu.memory_space<vmem>>, vector<512x128xf32>
    tpu.vector_store %arg5[%c0_8, %c0_9], %10 {strides = array<i32>} : memref<512x128xf32, #tpu.memory_space<vmem>>, vector<512x128xf32>,
    return
  }
  func.func @transform_0(%arg0: i32) -> (i32, i32) {
    %c0_i32 = arith.constant 0 : i32
    %c0_i32_0 = arith.constant 0 : i32
    return %arg0, %c0_i32 : i32, i32
  }
  func.func @transform_1(%arg0: i32) -> (i32, i32) {
    %c0_i32 = arith.constant 0 : i32
    %c0_i32_0 = arith.constant 0 : i32
    %c0_i32_1 = arith.constant 0 : i32
    return %c0_i32, %c0_i32_0 : i32, i32
  }
  func.func @transform_2(%arg0: i32) -> (i32, i32) {
    %c0_i32 = arith.constant 0 : i32
    %c0_i32_0 = arith.constant 0 : i32
    %c0_i32_1 = arith.constant 0 : i32
    return %c0_i32, %c0_i32_0 : i32, i32
  }
  func.func @transform_3(%arg0: i32) -> (i32, i32) {
    %c0_i32 = arith.constant 0 : i32
    %c0_i32_0 = arith.constant 0 : i32
    %c0_i32_1 = arith.constant 0 : i32
    return %c0_i32, %c0_i32_0 : i32, i32
  }
  func.func @transform_4(%arg0: i32) -> (i32, i32) {
    %c0_i32 = arith.constant 0 : i32
    %c0_i32_0 = arith.constant 0 : i32
    return %arg0, %c0_i32 : i32, i32
  }
}

</mosaic_0001>

<llo_original>
// kernel: reverse.12
$region0: #{reverse.12}
  #allocation0 [shape = 's32[1]{0}', space=sflag, size = 0x4, scoped, tag = 'scoped memory for reverse.12']
  %s0 = inlined_call_operand.vmem [shape: bf16[2,2,4,8], index: 0, kind: input, shape index: {}]
  %s1 = inlined_call_operand.vmem [shape: bf16[2,2,4,8], index: 1, kind: output, shape index: {}]
  %s2 = scalar_lea.vmem %s0, 6
  %s4 = sor.u32 15, 7
  %s5 = sand.u32 %s4, 5
  %s6 = sshrl.u32 %s5, 1
  %s7 = sor.u32 %s5, %s6
  %s8 = sand.u32 3, %s7
  %v9 = vld [vmem:[%s2] sm:%s8]
  %v10 = vunpack.c.l.bf16 %v9
  %v11 = vunpack.c.h.bf16 %v9
  %v12 = vpack.c.bf16 0.0, %v10
  %13 = vst [vmem:[%s1] sm:$0x3] %v12
  %s14 = scalar_lea.vmem %s0, 2
  %s16 = sor.u32 15, 7
  %s17 = sand.u32 %s16, 5
  %s18 = sshrl.u32 %s17, 1
  %s19 = sor.u32 %s17, %s18
  %s20 = sand.u32 3, %s19
  %v21 = vld [vmem:[%s14] sm:%s20]
  %v22 = vunpack.c.l.bf16 %v21
  %v23 = vunpack.c.h.bf16 %v21
  %s24 = scalar_lea.vmem %s1, 4
  %v25 = vpack.c.bf16 0.0, %v22
  %26 = vst [vmem:[%s24] sm:$0x3] %v25
  %s27 = scalar_lea.vmem %s0, 4
  %s29 = sor.u32 15, 7
  %s30 = sand.u32 %s29, 5
  %s31 = sshrl.u32 %s30, 1
  %s32 = sor.u32 %s30, %s31
  %s33 = sand.u32 3, %s32
  %v34 = vld [vmem:[%s27] sm:%s33]
  %v35 = vunpack.c.l.bf16 %v34
  %v36 = vunpack.c.h.bf16 %v34
  %s37 = scalar_lea.vmem %s1, 2
  %v38 = vpack.c.bf16 0.0, %v35
  %39 = vst [vmem:[%s37] sm:$0x3] %v38
  %s41 = sor.u32 15, 7
  %s42 = sand.u32 %s41, 5
  %s43 = sshrl.u32 %s42, 1
  %s44 = sor.u32 %s42, %s43
  %s45 = sand.u32 3, %s44
  %v46 = vld [vmem:[%s0] sm:%s45]
  %v47 = vunpack.c.l.bf16 %v46
  %v48 = vunpack.c.h.bf16 %v46
  %s49 = scalar_lea.vmem %s1, 6
  %v50 = vpack.c.bf16 0.0, %v47
  %51 = vst [vmem:[%s49] sm:$0x3] %v50

// kernel: reverse.10
$region0: #{reverse.10}
  #allocation0 [shape = 's32[1]{0}', space=sflag, size = 0x4, scoped, tag = 'scoped memory for reverse.10']
  %s0 = inlined_call_operand.vmem [shape: bf16[2,3,4,8], index: 0, kind: input, shape index: {}]
  %s1 = inlined_call_operand.vmem [shape: bf16[2,3,4,8], index: 1, kind: output, shape index: {}]
  %s2 = scalar_lea.vmem %s0, 10
  %s4 = sor.u32 15, 7
  %s5 = sand.u32 %s4, 5
  %s6 = sshrl.u32 %s5, 1
  %s7 = sor.u32 %s5, %s6
  %s8 = sand.u32 3, %s7
  %v9 = vld [vmem:[%s2] sm:%s8]
  %v10 = vunpack.c.l.bf16 %v9
  %v11 = vunpack.c.h.bf16 %v9
  %v12 = vpack.c.bf16 0.0, %v10
  %13 = vst [vmem:[%s1] sm:$0x3] %v12
  %s14 = scalar_lea.vmem %s0, 4
  %s16 = sor.u32 15, 7
  %s17 = sand.u32 %s16, 5
  %s18 = sshrl.u32 %s17, 1
  %s19 = sor.u32 %s17, %s18
  %s20 = sand.u32 3, %s19
  %v21 = vld [vmem:[%s14] sm:%s20]
  %v22 = vunpack.c.l.bf16 %v21
  %v23 = vunpack.c.h.bf16 %v21
  %s24 = scalar_lea.vmem %s1, 6
  %v25 = vpack.c.bf16 0.0, %v22
  %26 = vst [vmem:[%s24] sm:$0x3] %v25
  %s27 = scalar_lea.vmem %s0, 8
  %s29 = sor.u32 15, 7
  %s30 = sand.u32 %s29, 5
  %s31 = sshrl.u32 %s30, 1
  %s32 = sor.u32 %s30, %s31
  %s33 = sand.u32 3, %s32
  %v34 = vld [vmem:[%s27] sm:%s33]
  %v35 = vunpack.c.l.bf16 %v34
  %v36 = vunpack.c.h.bf16 %v34
  %s37 = scalar_lea.vmem %s1, 2
  %v38 = vpack.c.bf16 0.0, %v35
  %39 = vst [vmem:[%s37] sm:$0x3] %v38
  %s40 = scalar_lea.vmem %s0, 2
  %s42 = sor.u32 15, 7
  %s43 = sand.u32 %s42, 5
  %s44 = sshrl.u32 %s43, 1
  %s45 = sor.u32 %s43, %s44
  %s46 = sand.u32 3, %s45
  %v47 = vld [vmem:[%s40] sm:%s46]
  %v48 = vunpack.c.l.bf16 %v47
  %v49 = vunpack.c.h.bf16 %v47
  %s50 = scalar_lea.vmem %s1, 8
  %v51 = vpack.c.bf16 0.0, %v48
  %52 = vst [vmem:[%s50] sm:$0x3] %v51
  %s53 = scalar_lea.vmem %s0, 6
  %s55 = sor.u32 15, 7
  %s56 = sand.u32 %s55, 5
  %s57 = sshrl.u32 %s56, 1
  %s58 = sor.u32 %s56, %s57
  %s59 = sand.u32 3, %s58
  %v60 = vld [vmem:[%s53] sm:%s59]
  %v61 = vunpack.c.l.bf16 %v60
  %v62 = vunpack.c.h.bf16 %v60
  %s63 = scalar_lea.vmem %s1, 4
  %v64 = vpack.c.bf16 0.0, %v61
  %65 = vst [vmem:[%s63] sm:$0x3] %v64
  %s67 = sor.u32 15, 7
  %s68 = sand.u32 %s67, 5
  %s69 = sshrl.u32 %s68, 1
  %s70 = sor.u32 %s68, %s69
  %s71 = sand.u32 3, %s70
  %v72 = vld [vmem:[%s0] sm:%s71]
  %v73 = vunpack.c.l.bf16 %v72
  %v74 = vunpack.c.h.bf16 %v72
  %s75 = scalar_lea.vmem %s1, 10
  %v76 = vpack.c.bf16 0.0, %v73
  %77 = vst [vmem:[%s75] sm:$0x3] %v76

// kernel: reverse.11
$region0: #{reverse.11}
  #allocation0 [shape = 's32[1]{0}', space=sflag, size = 0x4, scoped, tag = 'scoped memory for reverse.11']
  %s0 = inlined_call_operand.vmem [shape: bf16[3,2,4,8], index: 0, kind: input, shape index: {}]
  %s1 = inlined_call_operand.vmem [shape: bf16[3,2,4,8], index: 1, kind: output, shape index: {}]
  %s2 = scalar_lea.vmem %s0, 10
  %s4 = sor.u32 15, 7
  %s5 = sand.u32 %s4, 5
  %s6 = sshrl.u32 %s5, 1
  %s7 = sor.u32 %s5, %s6
  %s8 = sand.u32 3, %s7
  %v9 = vld [vmem:[%s2] sm:%s8]
  %v10 = vunpack.c.l.bf16 %v9
  %v11 = vunpack.c.h.bf16 %v9
  %v12 = vpack.c.bf16 0.0, %v10
  %13 = vst [vmem:[%s1] sm:$0x3] %v12
  %s14 = scalar_lea.vmem %s0, 6
  %s16 = sor.u32 15, 7
  %s17 = sand.u32 %s16, 5
  %s18 = sshrl.u32 %s17, 1
  %s19 = sor.u32 %s17, %s18
  %s20 = sand.u32 3, %s19
  %v21 = vld [vmem:[%s14] sm:%s20]
  %v22 = vunpack.c.l.bf16 %v21
  %v23 = vunpack.c.h.bf16 %v21
  %s24 = scalar_lea.vmem %s1, 4
  %v25 = vpack.c.bf16 0.0, %v22
  %26 = vst [vmem:[%s24] sm:$0x3] %v25
  %s27 = scalar_lea.vmem %s0, 2
  %s29 = sor.u32 15, 7
  %s30 = sand.u32 %s29, 5
  %s31 = sshrl.u32 %s30, 1
  %s32 = sor.u32 %s30, %s31
  %s33 = sand.u32 3, %s32
  %v34 = vld [vmem:[%s27] sm:%s33]
  %v35 = vunpack.c.l.bf16 %v34
  %v36 = vunpack.c.h.bf16 %v34
  %s37 = scalar_lea.vmem %s1, 8
  %v38 = vpack.c.bf16 0.0, %v35
  %39 = vst [vmem:[%s37] sm:$0x3] %v38
  %s40 = scalar_lea.vmem %s0, 8
  %s42 = sor.u32 15, 7
  %s43 = sand.u32 %s42, 5
  %s44 = sshrl.u32 %s43, 1
  %s45 = sor.u32 %s43, %s44
  %s46 = sand.u32 3, %s45
  %v47 = vld [vmem:[%s40] sm:%s46]
  %v48 = vunpack.c.l.bf16 %v47
  %v49 = vunpack.c.h.bf16 %v47
  %s50 = scalar_lea.vmem %s1, 2
  %v51 = vpack.c.bf16 0.0, %v48
  %52 = vst [vmem:[%s50] sm:$0x3] %v51
  %s53 = scalar_lea.vmem %s0, 4
  %s55 = sor.u32 15, 7
  %s56 = sand.u32 %s55, 5
  %s57 = sshrl.u32 %s56, 1
  %s58 = sor.u32 %s56, %s57
  %s59 = sand.u32 3, %s58
  %v60 = vld [vmem:[%s53] sm:%s59]
  %v61 = vunpack.c.l.bf16 %v60
  %v62 = vunpack.c.h.bf16 %v60
  %s63 = scalar_lea.vmem %s1, 6
  %v64 = vpack.c.bf16 0.0, %v61
  %65 = vst [vmem:[%s63] sm:$0x3] %v64
  %s67 = sor.u32 15, 7
  %s68 = sand.u32 %s67, 5
  %s69 = sshrl.u32 %s68, 1
  %s70 = sor.u32 %s68, %s69
  %s71 = sand.u32 3, %s70
  %v72 = vld [vmem:[%s0] sm:%s71]
  %v73 = vunpack.c.l.bf16 %v72
  %v74 = vunpack.c.h.bf16 %v72
  %s75 = scalar_lea.vmem %s1, 10
  %v76 = vpack.c.bf16 0.0, %v73
  %77 = vst [vmem:[%s75] sm:$0x3] %v76

// kernel: squeeze.2
$region0: #{squeeze.2}
  %s0 = inlined_call_operand.vmem [shape: f32[32], index: 0, kind: input, shape index: {}]
  %s1 = inlined_call_operand.vmem [shape: f32[4,8], index: 1, kind: output, shape index: {}]
  $region1: #{squeeze.2} parent=0
    #allocation0 [shape = 'u8[4096]{0}', space=vmem, size = 0x1000, scoped, tag = 'scoped mem for output reshape']
    #allocation1 [shape = 'u8[4096]{0}', space=vmem, size = 0x1000, scoped, tag = 'scoped mem for input reshape']
    %s3 = ssub.s32 2, 1
    %v4 = vld [vmem:[%s0] sm:%s3]
    %5 = vst [vmem:[#allocation1] sm:%s3] %v4
    %v6 = vld [vmem:[#allocation1] sm:$0x1]
    %vm7 = vcmask 64512
    %8 = vst.msk [vmem:[#allocation0] sm:$0x1] %vm7, %v6
    %v9 = vld [vmem:[#allocation1] sm:$0x1]
    %10 = vrot.lane.b32.xlu0 %v9, 120
    %v11 = vpop.permute.xlu0 %10
    %vm12 = vcmask 64512
    %s13 = scalar_lea.vmem [#allocation0], 1
    %14 = vst.msk [vmem:[%s13] sm:$0x1] %vm12, %v11
    %v15 = vld [vmem:[#allocation1] sm:$0x1]
    %16 = vrot.lane.b32.xlu0 %v15, 112
    %v17 = vpop.permute.xlu0 %16
    %vm18 = vcmask 64512
    %s19 = scalar_lea.vmem [#allocation0], 2
    %20 = vst.msk [vmem:[%s19] sm:$0x1] %vm18, %v17
    %v21 = vld [vmem:[#allocation1] sm:$0x1]
    %22 = vrot.lane.b32.xlu0 %v21, 104
    %v23 = vpop.permute.xlu0 %22
    %vm24 = vcmask 64512
    %s25 = scalar_lea.vmem [#allocation0], 3
    %26 = vst.msk [vmem:[%s25] sm:$0x1] %vm24, %v23
    %s28 = ssub.s32 16, 1
    %v29 = vld [vmem:[#allocation0] sm:%s28]
    %s31 = ssub.s32 16, 1
    %32 = vst [vmem:[%s1] sm:%s31] %v29

// kernel: tile.18
$region0: #{tile.18}
  #allocation0 [shape = 's32[1]{0}', space=sflag, size = 0x4, scoped, tag = 'scoped memory for tile.18']
  %s0 = inlined_call_operand.vmem [shape: f32[8], index: 0, kind: input, shape index: {}]
  %s1 = inlined_call_operand.vmem [shape: f32[4,8], index: 1, kind: output, shape index: {}]
  // Predicated region
  $region2: #{tile.18} parent=0 // pred_check
    _
  $region3: #{tile.18} parent=0 // pred_check_branch
    %3 = sbr.rel (0) target = $region5
  $region4: #{tile.18} parent=0 // pred_region
    _
  $region5: #{tile.18} parent=0 // pred_fallthru
    _
  %v4 = vld [vmem:[%s0] ss:$0 sm:$0xff]
  %5 = vst [vmem:[%s1] sm:$0xf] %v4

// kernel: tile.19
$region0: #{tile.19}
  %s0 = inlined_call_operand.vmem [shape: f32[4,8], index: 0, kind: input, shape index: {}]
  %s1 = inlined_call_operand.vmem [shape: f32[32], index: 1, kind: output, shape index: {}]
  $region1: #{tile.19} parent=0
    #allocation0 [shape = 'u8[4096]{0}', space=vmem, size = 0x1000, scoped, tag = 'scoped mem for output reshape']
    #allocation1 [shape = 'u8[4096]{0}', space=vmem, size = 0x1000, scoped, tag = 'scoped mem for input reshape']
    %s3 = ssub.s32 16, 1
    %v4 = vld [vmem:[%s0] sm:%s3]
    %5 = vst [vmem:[#allocation1] sm:%s3] %v4
    %v6 = vld [vmem:[#allocation1] sm:$0x1]
    %vm7 = vcmask 64512
    %8 = vst.msk [vmem:[#allocation0] sm:$0x1] %vm7, %v6
    %s9 = scalar_lea.vmem [#allocation1], 3
    %v10 = vld [vmem:[%s9] sm:$0x1]
    %11 = vrot.lane.b32.xlu0 %v10, 24
    %v12 = vpop.permute.xlu0 %11
    %vm13 = vcmask 261312
    %14 = vst.msk [vmem:[#allocation0] sm:$0x1] %vm13, %v12
    %s15 = scalar_lea.vmem [#allocation1], 2
    %v16 = vld [vmem:[%s15] sm:$0x1]
    %17 = vrot.lane.b32.xlu0 %v16, 16
    %v18 = vpop.permute.xlu0 %17
    %vm19 = vcmask 195712
    %20 = vst.msk [vmem:[#allocation0] sm:$0x1] %vm19, %v18
    %s21 = scalar_lea.vmem [#allocation1], 1
    %v22 = vld [vmem:[%s21] sm:$0x1]
    %23 = vrot.lane.b32.xlu0 %v22, 8
    %v24 = vpop.permute.xlu0 %23
    %vm25 = vcmask 130112
    %26 = vst.msk [vmem:[#allocation0] sm:$0x1] %vm25, %v24
    %s28 = ssub.s32 2, 1
    %v29 = vld [vmem:[#allocation0] sm:%s28]
    %s31 = ssub.s32 2, 1
    %32 = vst [vmem:[%s1] sm:%s31] %v29

// kernel: fractionally_strided_conv_block.2
$region0: #{fractionally_strided_conv_block.2}
  #allocation0 [shape = 'u32[]', space=smem, size = 0x4, offset = 0x4, fixed_abs, tag = 'smem constant byte address 0x4 - core index']
  #allocation1 [shape = 'u32[72,128]{1,0:T(1,128)}', space=vmem, size = 0x9000, scoped, tag = 'internal scratch']
  %s0 = inlined_call_operand.vmem [shape: bf16[512,64], index: 0, kind: input, shape index: {}]
  %s1 = inlined_call_operand.vmem [shape: bf16[64,128], index: 1, kind: input, shape index: {}]
  %s2 = inlined_call_operand.vmem [shape: f32[1,2,128], index: 2, kind: output, shape index: {}]
  %s3 = sld [smem:[#allocation0]]
  $region18: #{fractionally_strided_conv_block.2} parent=0
    _
  %s5 = ssub.s32 1, %s3
  %s6 = scalar_select 0, %s5, %s3
  // Predicated region
  $region2: #{fractionally_strided_conv_block.2} parent=0 // pred_check
    _
  $region3: #{fractionally_strided_conv_block.2} parent=0 // pred_check_branch
    %8 = sbr.rel (0) target = $region5
  $region4: #{fractionally_strided_conv_block.2} parent=0 // pred_region
    _
  $region5: #{fractionally_strided_conv_block.2} parent=0 // pred_fallthru
    _
  // Predicated region
  $region6: #{fractionally_strided_conv_block.2} parent=0 // pred_check
    _
  $region7: #{fractionally_strided_conv_block.2} parent=0 // pred_check_branch
    %10 = sbr.rel (0) target = $region9
  $region8: #{fractionally_strided_conv_block.2} parent=0 // pred_region
    _
  $region9: #{fractionally_strided_conv_block.2} parent=0 // pred_fallthru
    _
  %v12 = vld [vmem:[%s0] sm:$0xf]
  %v13 = vld [vmem:[%s0 + $0x4] sm:$0xf]
  %v14 = vld [vmem:[%s0 + $0x8] sm:$0xf]
  %v15 = vld [vmem:[%s0 + $0xc] sm:$0xf]
  %v16 = vld [vmem:[%s0 + $0x10] sm:$0xf]
  %v17 = vld [vmem:[%s0 + $0x14] sm:$0xf]
  %v18 = vld [vmem:[%s0 + $0x18] sm:$0xf]
  %v19 = vld [vmem:[%s0 + $0x1c] sm:$0xf]
  %v20 = vld [vmem:[%s0 + $0x20] sm:$0xf]
  %v21 = vld [vmem:[%s0 + $0x24] sm:$0xf]
  %v22 = vld [vmem:[%s0 + $0x28] sm:$0xf]
  %v23 = vld [vmem:[%s0 + $0x2c] sm:$0xf]
  %v24 = vld [vmem:[%s0 + $0x30] sm:$0xf]
  %v25 = vld [vmem:[%s0 + $0x34] sm:$0xf]
  %v26 = vld [vmem:[%s0 + $0x38] sm:$0xf]
  %v27 = vld [vmem:[%s0 + $0x3c] sm:$0xf]
  %v28 = vld [vmem:[%s0 + $0x40] sm:$0xf]
  %v29 = vld [vmem:[%s0 + $0x44] sm:$0xf]
  %v30 = vld [vmem:[%s0 + $0x48] sm:$0xf]
  %v31 = vld [vmem:[%s0 + $0x4c] sm:$0xf]
  %v32 = vld [vmem:[%s0 + $0x50] sm:$0xf]
  %v33 = vld [vmem:[%s0 + $0x54] sm:$0xf]
  %v34 = vld [vmem:[%s0 + $0x58] sm:$0xf]
  %v35 = vld [vmem:[%s0 + $0x5c] sm:$0xf]
  %v36 = vld [vmem:[%s0 + $0x60] sm:$0xf]
  %v37 = vld [vmem:[%s0 + $0x64] sm:$0xf]
  %v38 = vld [vmem:[%s0 + $0x68] sm:$0xf]
  %v39 = vld [vmem:[%s0 + $0x6c] sm:$0xf]
  %v40 = vld [vmem:[%s0 + $0x70] sm:$0xf]
  %v41 = vld [vmem:[%s0 + $0x74] sm:$0xf]
  %v42 = vld [vmem:[%s0 + $0x78] sm:$0xf]
  %v43 = vld [vmem:[%s0 + $0x7c] sm:$0xf]
  %v44 = vld [vmem:[%s0 + $0x80] sm:$0xf]
  %v45 = vld [vmem:[%s0 + $0x84] sm:$0xf]
  %v46 = vld [vmem:[%s0 + $0x88] sm:$0xf]
  %v47 = vld [vmem:[%s0 + $0x8c] sm:$0xf]
  %v48 = vld [vmem:[%s0 + $0x90] sm:$0xf]
  %v49 = vld [vmem:[%s0 + $0x94] sm:$0xf]
  %v50 = vld [vmem:[%s0 + $0x98] sm:$0xf]
  %v51 = vld [vmem:[%s0 + $0x9c] sm:$0xf]
  %v52 = vld [vmem:[%s0 + $0xa0] sm:$0xf]
  %v53 = vld [vmem:[%s0 + $0xa4] sm:$0xf]
  %v54 = vld [vmem:[%s0 + $0xa8] sm:$0xf]
  %v55 = vld [vmem:[%s0 + $0xac] sm:$0xf]
  %v56 = vld [vmem:[%s0 + $0xb0] sm:$0xf]
  %v57 = vld [vmem:[%s0 + $0xb4] sm:$0xf]
  %v58 = vld [vmem:[%s0 + $0xb8] sm:$0xf]
  %v59 = vld [vmem:[%s0 + $0xbc] sm:$0xf]
  %v60 = vld [vmem:[%s0 + $0xc0] sm:$0xf]
  %v61 = vld [vmem:[%s0 + $0xc4] sm:$0xf]
  %v62 = vld [vmem:[%s0 + $0xc8] sm:$0xf]
  %v63 = vld [vmem:[%s0 + $0xcc] sm:$0xf]
  %v64 = vld [vmem:[%s0 + $0xd0] sm:$0xf]
  %v65 = vld [vmem:[%s0 + $0xd4] sm:$0xf]
  %v66 = vld [vmem:[%s0 + $0xd8] sm:$0xf]
  %v67 = vld [vmem:[%s0 + $0xdc] sm:$0xf]
  %v68 = vld [vmem:[%s0 + $0xe0] sm:$0xf]
  %v69 = vld [vmem:[%s0 + $0xe4] sm:$0xf]
  %v70 = vld [vmem:[%s0 + $0xe8] sm:$0xf]
  %v71 = vld [vmem:[%s0 + $0xec] sm:$0xf]
  %v72 = vld [vmem:[%s0 + $0xf0] sm:$0xf]
  %v73 = vld [vmem:[%s0 + $0xf4] sm:$0xf]
  %v74 = vld [vmem:[%s0 + $0xf8] sm:$0xf]
  %v75 = vld [vmem:[%s0 + $0xfc] sm:$0xf]
  %v76 = vld [vmem:[%s1] sm:$0xf]
  %v77 = vld [vmem:[%s1 + $0x4] sm:$0xf]
  %v78 = vld [vmem:[%s1 + $0x8] sm:$0xf]
  %v79 = vld [vmem:[%s1 + $0xc] sm:$0xf]
  %v80 = vld [vmem:[%s1 + $0x10] sm:$0xf]
  %v81 = vld [vmem:[%s1 + $0x14] sm:$0xf]
  %v82 = vld [vmem:[%s1 + $0x18] sm:$0xf]
  %v83 = vld [vmem:[%s1 + $0x1c] sm:$0xf]
  %v148 = vunpack.c.l.b16 %v12
  %v149 = vunpack.c.l.b16 %v13
  %v150 = vunpack.c.l.b16 %v14
  %v151 = vunpack.c.l.b16 %v15
  %v152 = vunpack.c.l.b16 %v16
  %v153 = vunpack.c.l.b16 %v17
  %v154 = vunpack.c.l.b16 %v18
  %v155 = vunpack.c.l.b16 %v19
  %v156 = vunpack.c.l.b16 %v20
  %v157 = vunpack.c.l.b16 %v21
  %v158 = vunpack.c.l.b16 %v22
  %v159 = vunpack.c.l.b16 %v23
  %v160 = vunpack.c.l.b16 %v24
  %v161 = vunpack.c.l.b16 %v25
  %v162 = vunpack.c.l.b16 %v26
  %v163 = vunpack.c.l.b16 %v27
  %v164 = vunpack.c.l.b16 %v28
  %v165 = vunpack.c.l.b16 %v29
  %v166 = vunpack.c.l.b16 %v30
  %v167 = vunpack.c.l.b16 %v31
  %v168 = vunpack.c.l.b16 %v32
  %v169 = vunpack.c.l.b16 %v33
  %v170 = vunpack.c.l.b16 %v34
  %v171 = vunpack.c.l.b16 %v35
  %v172 = vunpack.c.l.b16 %v36
  %v173 = vunpack.c.l.b16 %v37
  %v174 = vunpack.c.l.b16 %v38
  %v175 = vunpack.c.l.b16 %v39
  %v176 = vunpack.c.l.b16 %v40
  %v177 = vunpack.c.l.b16 %v41
  %v178 = vunpack.c.l.b16 %v42
  %v179 = vunpack.c.l.b16 %v43
  %v180 = vunpack.c.l.b16 %v44
  %v181 = vunpack.c.l.b16 %v45
  %v182 = vunpack.c.l.b16 %v46
  %v183 = vunpack.c.l.b16 %v47
  %v184 = vunpack.c.l.b16 %v48
  %v185 = vunpack.c.l.b16 %v49
  %v186 = vunpack.c.l.b16 %v50
  %v187 = vunpack.c.l.b16 %v51
  %v188 = vunpack.c.l.b16 %v52
  %v189 = vunpack.c.l.b16 %v53
  %v190 = vunpack.c.l.b16 %v54
  %v191 = vunpack.c.l.b16 %v55
  %v192 = vunpack.c.l.b16 %v56
  %v193 = vunpack.c.l.b16 %v57
  %v194 = vunpack.c.l.b16 %v58
  %v195 = vunpack.c.l.b16 %v59
  %v196 = vunpack.c.l.b16 %v60
  %v197 = vunpack.c.l.b16 %v61
  %v198 = vunpack.c.l.b16 %v62
  %v199 = vunpack.c.l.b16 %v63
  %v200 = vunpack.c.l.b16 %v64
  %v201 = vunpack.c.l.b16 %v65
  %v202 = vunpack.c.l.b16 %v66
  %v203 = vunpack.c.l.b16 %v67
  %v204 = vunpack.c.l.b16 %v68
  %v205 = vunpack.c.l.b16 %v69
  %v206 = vunpack.c.l.b16 %v70
  %v207 = vunpack.c.l.b16 %v71
  %v208 = vunpack.c.l.b16 %v72
  %v209 = vunpack.c.l.b16 %v73
  %v210 = vunpack.c.l.b16 %v74
  %v211 = vunpack.c.l.b16 %v75
  %v212 = vpack.c.b16 %v149, %v148
  %v213 = vpack.c.b16 %v151, %v150
  %v214 = vpack.c.b16 %v153, %v152
  %v215 = vpack.c.b16 %v155, %v154
  %v216 = vpack.c.b16 %v157, %v156
  %v217 = vpack.c.b16 %v159, %v158
  %v218 = vpack.c.b16 %v161, %v160
  %v219 = vpack.c.b16 %v163, %v162
  %v220 = vpack.c.b16 %v165, %v164
  %v221 = vpack.c.b16 %v167, %v166
  %v222 = vpack.c.b16 %v169, %v168
  %v223 = vpack.c.b16 %v171, %v170
  %v224 = vpack.c.b16 %v173, %v172
  %v225 = vpack.c.b16 %v175, %v174
  %v226 = vpack.c.b16 %v177, %v176
  %v227 = vpack.c.b16 %v179, %v178
  %v228 = vpack.c.b16 %v181, %v180
  %v229 = vpack.c.b16 %v183, %v182
  %v230 = vpack.c.b16 %v185, %v184
  %v231 = vpack.c.b16 %v187, %v186
  %v232 = vpack.c.b16 %v189, %v188
  %v233 = vpack.c.b16 %v191, %v190
  %v234 = vpack.c.b16 %v193, %v192
  %v235 = vpack.c.b16 %v195, %v194
  %v236 = vpack.c.b16 %v197, %v196
  %v237 = vpack.c.b16 %v199, %v198
  %v238 = vpack.c.b16 %v201, %v200
  %v239 = vpack.c.b16 %v203, %v202
  %v240 = vpack.c.b16 %v205, %v204
  %v241 = vpack.c.b16 %v207, %v206
  %v242 = vpack.c.b16 %v209, %v208
  %v243 = vpack.c.b16 %v211, %v210
  %v252 = vunpack.c.l.b16 %v76
  %v253 = vunpack.c.l.b16 %v77
  %v254 = vunpack.c.l.b16 %v78
  %v255 = vunpack.c.l.b16 %v79
  %v256 = vunpack.c.l.b16 %v80
  %v257 = vunpack.c.l.b16 %v81
  %v258 = vunpack.c.l.b16 %v82
  %v259 = vunpack.c.l.b16 %v83
  %v260 = vpack.c.b16 %v253, %v252
  %v261 = vpack.c.b16 %v255, %v254
  %v262 = vpack.c.b16 %v257, %v256
  %v263 = vpack.c.b16 %v259, %v258
  %vm268 = vcmask 523264
  %v270 = vsel %vm268, %v212, 0
  %v273 = vsel %vm268, %v213, 0
  %v276 = vsel %vm268, %v214, 0
  %v279 = vsel %vm268, %v215, 0
  %v282 = vsel %vm268, %v216, 0
  %v285 = vsel %vm268, %v217, 0
  %v288 = vsel %vm268, %v218, 0
  %v291 = vsel %vm268, %v219, 0
  %v294 = vsel %vm268, %v220, 0
  %v297 = vsel %vm268, %v221, 0
  %v300 = vsel %vm268, %v222, 0
  %v303 = vsel %vm268, %v223, 0
  %v306 = vsel %vm268, %v224, 0
  %v309 = vsel %vm268, %v225, 0
  %v312 = vsel %vm268, %v226, 0
  %v315 = vsel %vm268, %v227, 0
  %v318 = vsel %vm268, %v228, 0
  %v321 = vsel %vm268, %v229, 0
  %v324 = vsel %vm268, %v230, 0
  %v327 = vsel %vm268, %v231, 0
  %v330 = vsel %vm268, %v232, 0
  %v333 = vsel %vm268, %v233, 0
  %v336 = vsel %vm268, %v234, 0
  %v339 = vsel %vm268, %v235, 0
  %v342 = vsel %vm268, %v236, 0
  %v345 = vsel %vm268, %v237, 0
  %v348 = vsel %vm268, %v238, 0
  %v351 = vsel %vm268, %v239, 0
  %v354 = vsel %vm268, %v240, 0
  %v357 = vsel %vm268, %v241, 0
  %v360 = vsel %vm268, %v242, 0
  %v363 = vsel %vm268, %v243, 0
  %365 = vmatpush.bf16.msra.mxu0 0
  %366 = vmatpush.bf16.msra.mxu0 0
  %367 = vmatpush.bf16.msra.mxu0 0
  %368 = vmatpush.bf16.msra.mxu0 0
  %369 = vmatpush.bf16.msra.mxu0 %v263
  %370 = vmatpush.bf16.msra.mxu0 %v262
  %371 = vmatpush.bf16.msra.mxu0 %v261
  %372 = vmatpush.bf16.msra.mxu0 %v260
  %373 = vmatmul.bf16.gmra.mxu0 %v270
  %v374 = vpop.f32.mrf.mxu0
  %v375 = vadd.f32 0.0, %v374
  %v376 = vpop.f32.mrf.mxu0
  %v377 = vadd.f32 0.0, %v376
  %378 = vmatmul.bf16.gmra.mxu0 %v273
  %v379 = vpop.f32.mrf.mxu0
  %v380 = vadd.f32 0.0, %v379
  %v381 = vpop.f32.mrf.mxu0
  %v382 = vadd.f32 0.0, %v381
  %383 = vmatmul.bf16.gmra.mxu0 %v276
  %v384 = vpop.f32.mrf.mxu0
  %v385 = vadd.f32 0.0, %v384
  %v386 = vpop.f32.mrf.mxu0
  %v387 = vadd.f32 0.0, %v386
  %388 = vmatmul.bf16.gmra.mxu0 %v279
  %v389 = vpop.f32.mrf.mxu0
  %v390 = vadd.f32 0.0, %v389
  %v391 = vpop.f32.mrf.mxu0
  %v392 = vadd.f32 0.0, %v391
  %393 = vmatmul.bf16.gmra.mxu0 %v282
  %v394 = vpop.f32.mrf.mxu0
  %v395 = vadd.f32 0.0, %v394
  %v396 = vpop.f32.mrf.mxu0
  %v397 = vadd.f32 0.0, %v396
  %398 = vmatmul.bf16.gmra.mxu0 %v285
  %v399 = vpop.f32.mrf.mxu0
  %v400 = vadd.f32 0.0, %v399
  %v401 = vpop.f32.mrf.mxu0
  %v402 = vadd.f32 0.0, %v401
  %403 = vmatmul.bf16.gmra.mxu0 %v288
  %v404 = vpop.f32.mrf.mxu0
  %v405 = vadd.f32 0.0, %v404
  %v406 = vpop.f32.mrf.mxu0
  %v407 = vadd.f32 0.0, %v406
  %408 = vmatmul.bf16.gmra.mxu0 %v291
  %v409 = vpop.f32.mrf.mxu0
  %v410 = vadd.f32 0.0, %v409
  %v411 = vpop.f32.mrf.mxu0
  %v412 = vadd.f32 0.0, %v411
  %413 = vmatmul.bf16.gmra.mxu0 %v294
  %v414 = vpop.f32.mrf.mxu0
  %v415 = vadd.f32 0.0, %v414
  %v416 = vpop.f32.mrf.mxu0
  %v417 = vadd.f32 0.0, %v416
  %418 = vmatmul.bf16.gmra.mxu0 %v297
  %v419 = vpop.f32.mrf.mxu0
  %v420 = vadd.f32 0.0, %v419
  %v421 = vpop.f32.mrf.mxu0
  %v422 = vadd.f32 0.0, %v421
  %423 = vmatmul.bf16.gmra.mxu0 %v300
  %v424 = vpop.f32.mrf.mxu0
  %v425 = vadd.f32 0.0, %v424
  %v426 = vpop.f32.mrf.mxu0
  %v427 = vadd.f32 0.0, %v426
  %428 = vmatmul.bf16.gmra.mxu0 %v303
  %v429 = vpop.f32.mrf.mxu0
  %v430 = vadd.f32 0.0, %v429
  %v431 = vpop.f32.mrf.mxu0
  %v432 = vadd.f32 0.0, %v431
  %433 = vmatmul.bf16.gmra.mxu0 %v306
  %v434 = vpop.f32.mrf.mxu0
  %v435 = vadd.f32 0.0, %v434
  %v436 = vpop.f32.mrf.mxu0
  %v437 = vadd.f32 0.0, %v436
  %438 = vmatmul.bf16.gmra.mxu0 %v309
  %v439 = vpop.f32.mrf.mxu0
  %v440 = vadd.f32 0.0, %v439
  %v441 = vpop.f32.mrf.mxu0
  %v442 = vadd.f32 0.0, %v441
  %443 = vmatmul.bf16.gmra.mxu0 %v312
  %v444 = vpop.f32.mrf.mxu0
  %v445 = vadd.f32 0.0, %v444
  %v446 = vpop.f32.mrf.mxu0
  %v447 = vadd.f32 0.0, %v446
  %448 = vmatmul.bf16.gmra.mxu0 %v315
  %v449 = vpop.f32.mrf.mxu0
  %v450 = vadd.f32 0.0, %v449
  %v451 = vpop.f32.mrf.mxu0
  %v452 = vadd.f32 0.0, %v451
  %453 = vmatmul.bf16.gmra.mxu0 %v318
  %v454 = vpop.f32.mrf.mxu0
  %v455 = vadd.f32 0.0, %v454
  %v456 = vpop.f32.mrf.mxu0
  %v457 = vadd.f32 0.0, %v456
  %458 = vmatmul.bf16.gmra.mxu0 %v321
  %v459 = vpop.f32.mrf.mxu0
  %v460 = vadd.f32 0.0, %v459
  %v461 = vpop.f32.mrf.mxu0
  %v462 = vadd.f32 0.0, %v461
  %463 = vmatmul.bf16.gmra.mxu0 %v324
  %v464 = vpop.f32.mrf.mxu0
  %v465 = vadd.f32 0.0, %v464
  %v466 = vpop.f32.mrf.mxu0
  %v467 = vadd.f32 0.0, %v466
  %468 = vmatmul.bf16.gmra.mxu0 %v327
  %v469 = vpop.f32.mrf.mxu0
  %v470 = vadd.f32 0.0, %v469
  %v471 = vpop.f32.mrf.mxu0
  %v472 = vadd.f32 0.0, %v471
  %473 = vmatmul.bf16.gmra.mxu0 %v330
  %v474 = vpop.f32.mrf.mxu0
  %v475 = vadd.f32 0.0, %v474
  %v476 = vpop.f32.mrf.mxu0
  %v477 = vadd.f32 0.0, %v476
  %478 = vmatmul.bf16.gmra.mxu0 %v333
  %v479 = vpop.f32.mrf.mxu0
  %v480 = vadd.f32 0.0, %v479
  %v481 = vpop.f32.mrf.mxu0
  %v482 = vadd.f32 0.0, %v481
  %483 = vmatmul.bf16.gmra.mxu0 %v336
  %v484 = vpop.f32.mrf.mxu0
  %v485 = vadd.f32 0.0, %v484
  %v486 = vpop.f32.mrf.mxu0
  %v487 = vadd.f32 0.0, %v486
  %488 = vmatmul.bf16.gmra.mxu0 %v339
  %v489 = vpop.f32.mrf.mxu0
  %v490 = vadd.f32 0.0, %v489
  %v491 = vpop.f32.mrf.mxu0
  %v492 = vadd.f32 0.0, %v491
  %493 = vmatmul.bf16.gmra.mxu0 %v342
  %v494 = vpop.f32.mrf.mxu0
  %v495 = vadd.f32 0.0, %v494
  %v496 = vpop.f32.mrf.mxu0
  %v497 = vadd.f32 0.0, %v496
  %498 = vmatmul.bf16.gmra.mxu0 %v345
  %v499 = vpop.f32.mrf.mxu0
  %v500 = vadd.f32 0.0, %v499
  %v501 = vpop.f32.mrf.mxu0
  %v502 = vadd.f32 0.0, %v501
  %503 = vmatmul.bf16.gmra.mxu0 %v348
  %v504 = vpop.f32.mrf.mxu0
  %v505 = vadd.f32 0.0, %v504
  %v506 = vpop.f32.mrf.mxu0
  %v507 = vadd.f32 0.0, %v506
  %508 = vmatmul.bf16.gmra.mxu0 %v351
  %v509 = vpop.f32.mrf.mxu0
  %v510 = vadd.f32 0.0, %v509
  %v511 = vpop.f32.mrf.mxu0
  %v512 = vadd.f32 0.0, %v511
  %513 = vmatmul.bf16.gmra.mxu0 %v354
  %v514 = vpop.f32.mrf.mxu0
  %v515 = vadd.f32 0.0, %v514
  %v516 = vpop.f32.mrf.mxu0
  %v517 = vadd.f32 0.0, %v516
  %518 = vmatmul.bf16.gmra.mxu0 %v357
  %v519 = vpop.f32.mrf.mxu0
  %v520 = vadd.f32 0.0, %v519
  %v521 = vpop.f32.mrf.mxu0
  %v522 = vadd.f32 0.0, %v521
  %523 = vmatmul.bf16.gmra.mxu0 %v360
  %v524 = vpop.f32.mrf.mxu0
  %v525 = vadd.f32 0.0, %v524
  %v526 = vpop.f32.mrf.mxu0
  %v527 = vadd.f32 0.0, %v526
  %528 = vmatmul.bf16.gmra.mxu0 %v363
  %v529 = vpop.f32.mrf.mxu0
  %v530 = vadd.f32 0.0, %v529
  %v531 = vpop.f32.mrf.mxu0
  %v532 = vadd.f32 0.0, %v531
  %533 = vdwg.mxu0
  %v534 = vadd.f32 %v375, %v377
  %v535 = vadd.f32 %v534, %v380
  %v536 = vadd.f32 %v535, %v382
  %v537 = vadd.f32 %v536, %v385
  %v538 = vadd.f32 %v537, %v387
  %v539 = vadd.f32 %v538, %v390
  %v540 = vadd.f32 %v539, %v392
  %v541 = vadd.f32 %v540, %v395
  %v542 = vadd.f32 %v541, %v397
  %v543 = vadd.f32 %v542, %v400
  %v544 = vadd.f32 %v543, %v402
  %v545 = vadd.f32 %v544, %v405
  %v546 = vadd.f32 %v545, %v407
  %v547 = vadd.f32 %v546, %v410
  %v548 = vadd.f32 %v547, %v412
  %v549 = vadd.f32 %v548, %v415
  %v550 = vadd.f32 %v549, %v417
  %v551 = vadd.f32 %v550, %v420
  %v552 = vadd.f32 %v551, %v422
  %v553 = vadd.f32 %v552, %v425
  %v554 = vadd.f32 %v553, %v427
  %v555 = vadd.f32 %v554, %v430
  %v556 = vadd.f32 %v555, %v432
  %v557 = vadd.f32 %v556, %v435
  %v558 = vadd.f32 %v557, %v437
  %v559 = vadd.f32 %v558, %v440
  %v560 = vadd.f32 %v559, %v442
  %v561 = vadd.f32 %v560, %v445
  %v562 = vadd.f32 %v561, %v447
  %v563 = vadd.f32 %v562, %v450
  %v564 = vadd.f32 %v563, %v452
  %v565 = vadd.f32 %v564, %v455
  %v566 = vadd.f32 %v565, %v457
  %v567 = vadd.f32 %v566, %v460
  %v568 = vadd.f32 %v567, %v462
  %v569 = vadd.f32 %v568, %v465
  %v570 = vadd.f32 %v569, %v467
  %v571 = vadd.f32 %v570, %v470
  %v572 = vadd.f32 %v571, %v472
  %v573 = vadd.f32 %v572, %v475
  %v574 = vadd.f32 %v573, %v477
  %v575 = vadd.f32 %v574, %v480
  %v576 = vadd.f32 %v575, %v482
  %v577 = vadd.f32 %v576, %v485
  %v578 = vadd.f32 %v577, %v487
  %v579 = vadd.f32 %v578, %v490
  %v580 = vadd.f32 %v579, %v492
  %v581 = vadd.f32 %v580, %v495
  %v582 = vadd.f32 %v581, %v497
  %v583 = vadd.f32 %v582, %v500
  %v584 = vadd.f32 %v583, %v502
  %v585 = vadd.f32 %v584, %v505
  %v586 = vadd.f32 %v585, %v507
  %v587 = vadd.f32 %v586, %v510
  %v588 = vadd.f32 %v587, %v512
  %v589 = vadd.f32 %v588, %v515
  %v590 = vadd.f32 %v589, %v517
  %v591 = vadd.f32 %v590, %v520
  %v592 = vadd.f32 %v591, %v522
  %v593 = vadd.f32 %v592, %v525
  %v594 = vadd.f32 %v593, %v527
  %v595 = vadd.f32 %v594, %v530
  %v596 = vadd.f32 %v595, %v532
  %v597 = vrot.slane %v596, 4
  %v598 = vadd.f32 %v596, %v597
  %v599 = vrot.slane %v598, 2
  %v600 = vadd.f32 %v598, %v599
  %v601 = vrot.slane %v600, 1
  %v602 = vadd.f32 %v600, %v601
  %v603 = vmul.f32 %v375, %v375
  %v604 = vmul.f32 %v377, %v377
  %v605 = vmul.f32 %v380, %v380
  %v606 = vmul.f32 %v382, %v382
  %v607 = vmul.f32 %v385, %v385
  %v608 = vmul.f32 %v387, %v387
  %v609 = vmul.f32 %v390, %v390
  %v610 = vmul.f32 %v392, %v392
  %v611 = vmul.f32 %v395, %v395
  %v612 = vmul.f32 %v397, %v397
  %v613 = vmul.f32 %v400, %v400
  %v614 = vmul.f32 %v402, %v402
  %v615 = vmul.f32 %v405, %v405
  %v616 = vmul.f32 %v407, %v407
  %v617 = vmul.f32 %v410, %v410
  %v618 = vmul.f32 %v412, %v412
  %v619 = vmul.f32 %v415, %v415
  %v620 = vmul.f32 %v417, %v417
  %v621 = vmul.f32 %v420, %v420
  %v622 = vmul.f32 %v422, %v422
  %v623 = vmul.f32 %v425, %v425
  %v624 = vmul.f32 %v427, %v427
  %v625 = vmul.f32 %v430, %v430
  %v626 = vmul.f32 %v432, %v432
  %v627 = vmul.f32 %v435, %v435
  %v628 = vmul.f32 %v437, %v437
  %v629 = vmul.f32 %v440, %v440
  %v630 = vmul.f32 %v442, %v442
  %v631 = vmul.f32 %v445, %v445
  %v632 = vmul.f32 %v447, %v447
  %v633 = vmul.f32 %v450, %v450
  %v634 = vmul.f32 %v452, %v452
  %v635 = vmul.f32 %v455, %v455
  %v636 = vmul.f32 %v457, %v457
  %v637 = vmul.f32 %v460, %v460
  %v638 = vmul.f32 %v462, %v462
  %v639 = vmul.f32 %v465, %v465
  %v640 = vmul.f32 %v467, %v467
  %v641 = vmul.f32 %v470, %v470
  %v642 = vmul.f32 %v472, %v472
  %v643 = vmul.f32 %v475, %v475
  %v644 = vmul.f32 %v477, %v477
  %v645 = vmul.f32 %v480, %v480
  %v646 = vmul.f32 %v482, %v482
  %v647 = vmul.f32 %v485, %v485
  %v648 = vmul.f32 %v487, %v487
  %v649 = vmul.f32 %v490, %v490
  %v650 = vmul.f32 %v492, %v492
  %v651 = vmul.f32 %v495, %v495
  %v652 = vmul.f32 %v497, %v497
  %v653 = vmul.f32 %v500, %v500
  %v654 = vmul.f32 %v502, %v502
  %v655 = vmul.f32 %v505, %v505
  %v656 = vmul.f32 %v507, %v507
  %v657 = vmul.f32 %v510, %v510
  %v658 = vmul.f32 %v512, %v512
  %v659 = vmul.f32 %v515, %v515
  %v660 = vmul.f32 %v517, %v517
  %v661 = vmul.f32 %v520, %v520
  %v662 = vmul.f32 %v522, %v522
  %v663 = vmul.f32 %v525, %v525
  %v664 = vmul.f32 %v527, %v527
  %v665 = vmul.f32 %v530, %v530
  %v666 = vmul.f32 %v532, %v532
  %v667 = vadd.f32 %v603, %v604
  %v668 = vadd.f32 %v667, %v605
  %v669 = vadd.f32 %v668, %v606
  %v670 = vadd.f32 %v669, %v607
  %v671 = vadd.f32 %v670, %v608
  %v672 = vadd.f32 %v671, %v609
  %v673 = vadd.f32 %v672, %v610
  %v674 = vadd.f32 %v673, %v611
  %v675 = vadd.f32 %v674, %v612
  %v676 = vadd.f32 %v675, %v613
  %v677 = vadd.f32 %v676, %v614
  %v678 = vadd.f32 %v677, %v615
  %v679 = vadd.f32 %v678, %v616
  %v680 = vadd.f32 %v679, %v617
  %v681 = vadd.f32 %v680, %v618
  %v682 = vadd.f32 %v681, %v619
  %v683 = vadd.f32 %v682, %v620
  %v684 = vadd.f32 %v683, %v621
  %v685 = vadd.f32 %v684, %v622
  %v686 = vadd.f32 %v685, %v623
  %v687 = vadd.f32 %v686, %v624
  %v688 = vadd.f32 %v687, %v625
  %v689 = vadd.f32 %v688, %v626
  %v690 = vadd.f32 %v689, %v627
  %v691 = vadd.f32 %v690, %v628
  %v692 = vadd.f32 %v691, %v629
  %v693 = vadd.f32 %v692, %v630
  %v694 = vadd.f32 %v693, %v631
  %v695 = vadd.f32 %v694, %v632
  %v696 = vadd.f32 %v695, %v633
  %v697 = vadd.f32 %v696, %v634
  %v698 = vadd.f32 %v697, %v635
  %v699 = vadd.f32 %v698, %v636
  %v700 = vadd.f32 %v699, %v637
  %v701 = vadd.f32 %v700, %v638
  %v702 = vadd.f32 %v701, %v639
  %v703 = vadd.f32 %v702, %v640
  %v704 = vadd.f32 %v703, %v641
  %v705 = vadd.f32 %v704, %v642
  %v706 = vadd.f32 %v705, %v643
  %v707 = vadd.f32 %v706, %v644
  %v708 = vadd.f32 %v707, %v645
  %v709 = vadd.f32 %v708, %v646
  %v710 = vadd.f32 %v709, %v647
  %v711 = vadd.f32 %v710, %v648
  %v712 = vadd.f32 %v711, %v649
  %v713 = vadd.f32 %v712, %v650
  %v714 = vadd.f32 %v713, %v651
  %v715 = vadd.f32 %v714, %v652
  %v716 = vadd.f32 %v715, %v653
  %v717 = vadd.f32 %v716, %v654
  %v718 = vadd.f32 %v717, %v655
  %v719 = vadd.f32 %v718, %v656
  %v720 = vadd.f32 %v719, %v657
  %v721 = vadd.f32 %v720, %v658
  %v722 = vadd.f32 %v721, %v659
  %v723 = vadd.f32 %v722, %v660
  %v724 = vadd.f32 %v723, %v661
  %v725 = vadd.f32 %v724, %v662
  %v726 = vadd.f32 %v725, %v663
  %v727 = vadd.f32 %v726, %v664
  %v728 = vadd.f32 %v727, %v665
  %v729 = vadd.f32 %v728, %v666
  %v730 = vrot.slane %v729, 4
  %v731 = vadd.f32 %v729, %v730
  %v732 = vrot.slane %v731, 2
  %v733 = vadd.f32 %v731, %v732
  %v734 = vrot.slane %v733, 1
  %v735 = vadd.f32 %v733, %v734
  %vm736 = vcmask 1040384
  %v737 = vsel %vm736, %v602, %v735
  %738 = vst [vmem:[%s2] sm:$0x3] %v737
  // Predicated region
  $region10: #{fractionally_strided_conv_block.2} parent=0 // pred_check
    _
  $region11: #{fractionally_strided_conv_block.2} parent=0 // pred_check_branch
    %740 = sbr.rel (0) target = $region13
  $region12: #{fractionally_strided_conv_block.2} parent=0 // pred_region
    _
  $region13: #{fractionally_strided_conv_block.2} parent=0 // pred_fallthru
    _
  // Predicated region
  $region14: #{fractionally_strided_conv_block.2} parent=0 // pred_check
    _
  $region15: #{fractionally_strided_conv_block.2} parent=0 // pred_check_branch
    %742 = sbr.rel (0) target = $region17
  $region16: #{fractionally_strided_conv_block.2} parent=0 // pred_region
    _
  $region17: #{fractionally_strided_conv_block.2} parent=0 // pred_fallthru
    _

// kernel: fractionally_strided_conv_block.3
$region0: #{fractionally_strided_conv_block.3}
  #allocation0 [shape = 'u32[]', space=smem, size = 0x4, offset = 0x4, fixed_abs, tag = 'smem constant byte address 0x4 - core index']
  #allocation1 [shape = 'u32[72,128]{1,0:T(1,128)}', space=vmem, size = 0x9000, scoped, tag = 'internal scratch']
  %s0 = inlined_call_operand.vmem [shape: bf16[512,64], index: 0, kind: input, shape index: {}]
  %s1 = inlined_call_operand.vmem [shape: bf16[64,128], index: 1, kind: input, shape index: {}]
  %s2 = inlined_call_operand.vmem [shape: f32[1,128], index: 2, kind: input, shape index: {}]
  %s3 = inlined_call_operand.vmem [shape: f32[1,128], index: 3, kind: input, shape index: {}]
  %s4 = inlined_call_operand.vmem [shape: f32[512,128], index: 4, kind: output, shape index: {}]
  %s5 = sld [smem:[#allocation0]]
  $region26: #{fractionally_strided_conv_block.3} parent=0
    _
  %s7 = ssub.s32 1, %s5
  %s8 = scalar_select 0, %s7, %s5
  // Predicated region
  $region2: #{fractionally_strided_conv_block.3} parent=0 // pred_check
    _
  $region3: #{fractionally_strided_conv_block.3} parent=0 // pred_check_branch
    %10 = sbr.rel (0) target = $region5
  $region4: #{fractionally_strided_conv_block.3} parent=0 // pred_region
    _
  $region5: #{fractionally_strided_conv_block.3} parent=0 // pred_fallthru
    _
  // Predicated region
  $region6: #{fractionally_strided_conv_block.3} parent=0 // pred_check
    _
  $region7: #{fractionally_strided_conv_block.3} parent=0 // pred_check_branch
    %12 = sbr.rel (0) target = $region9
  $region8: #{fractionally_strided_conv_block.3} parent=0 // pred_region
    _
  $region9: #{fractionally_strided_conv_block.3} parent=0 // pred_fallthru
    _
  // Predicated region
  $region10: #{fractionally_strided_conv_block.3} parent=0 // pred_check
    _
  $region11: #{fractionally_strided_conv_block.3} parent=0 // pred_check_branch
    %14 = sbr.rel (0) target = $region13
  $region12: #{fractionally_strided_conv_block.3} parent=0 // pred_region
    _
  $region13: #{fractionally_strided_conv_block.3} parent=0 // pred_fallthru
    _
  // Predicated region
  $region14: #{fractionally_strided_conv_block.3} parent=0 // pred_check
    _
  $region15: #{fractionally_strided_conv_block.3} parent=0 // pred_check_branch
    %16 = sbr.rel (0) target = $region17
  $region16: #{fractionally_strided_conv_block.3} parent=0 // pred_region
    _
  $region17: #{fractionally_strided_conv_block.3} parent=0 // pred_fallthru
    _
  %v18 = vld [vmem:[%s0] sm:$0xf]
  %v19 = vld [vmem:[%s0 + $0x4] sm:$0xf]
  %v20 = vld [vmem:[%s0 + $0x8] sm:$0xf]
  %v21 = vld [vmem:[%s0 + $0xc] sm:$0xf]
  %v22 = vld [vmem:[%s0 + $0x10] sm:$0xf]
  %v23 = vld [vmem:[%s0 + $0x14] sm:$0xf]
  %v24 = vld [vmem:[%s0 + $0x18] sm:$0xf]
  %v25 = vld [vmem:[%s0 + $0x1c] sm:$0xf]
  %v26 = vld [vmem:[%s0 + $0x20] sm:$0xf]
  %v27 = vld [vmem:[%s0 + $0x24] sm:$0xf]
  %v28 = vld [vmem:[%s0 + $0x28] sm:$0xf]
  %v29 = vld [vmem:[%s0 + $0x2c] sm:$0xf]
  %v30 = vld [vmem:[%s0 + $0x30] sm:$0xf]
  %v31 = vld [vmem:[%s0 + $0x34] sm:$0xf]
  %v32 = vld [vmem:[%s0 + $0x38] sm:$0xf]
  %v33 = vld [vmem:[%s0 + $0x3c] sm:$0xf]
  %v34 = vld [vmem:[%s0 + $0x40] sm:$0xf]
  %v35 = vld [vmem:[%s0 + $0x44] sm:$0xf]
  %v36 = vld [vmem:[%s0 + $0x48] sm:$0xf]
  %v37 = vld [vmem:[%s0 + $0x4c] sm:$0xf]
  %v38 = vld [vmem:[%s0 + $0x50] sm:$0xf]
  %v39 = vld [vmem:[%s0 + $0x54] sm:$0xf]
  %v40 = vld [vmem:[%s0 + $0x58] sm:$0xf]
  %v41 = vld [vmem:[%s0 + $0x5c] sm:$0xf]
  %v42 = vld [vmem:[%s0 + $0x60] sm:$0xf]
  %v43 = vld [vmem:[%s0 + $0x64] sm:$0xf]
  %v44 = vld [vmem:[%s0 + $0x68] sm:$0xf]
  %v45 = vld [vmem:[%s0 + $0x6c] sm:$0xf]
  %v46 = vld [vmem:[%s0 + $0x70] sm:$0xf]
  %v47 = vld [vmem:[%s0 + $0x74] sm:$0xf]
  %v48 = vld [vmem:[%s0 + $0x78] sm:$0xf]
  %v49 = vld [vmem:[%s0 + $0x7c] sm:$0xf]
  %v50 = vld [vmem:[%s0 + $0x80] sm:$0xf]
  %v51 = vld [vmem:[%s0 + $0x84] sm:$0xf]
  %v52 = vld [vmem:[%s0 + $0x88] sm:$0xf]
  %v53 = vld [vmem:[%s0 + $0x8c] sm:$0xf]
  %v54 = vld [vmem:[%s0 + $0x90] sm:$0xf]
  %v55 = vld [vmem:[%s0 + $0x94] sm:$0xf]
  %v56 = vld [vmem:[%s0 + $0x98] sm:$0xf]
  %v57 = vld [vmem:[%s0 + $0x9c] sm:$0xf]
  %v58 = vld [vmem:[%s0 + $0xa0] sm:$0xf]
  %v59 = vld [vmem:[%s0 + $0xa4] sm:$0xf]
  %v60 = vld [vmem:[%s0 + $0xa8] sm:$0xf]
  %v61 = vld [vmem:[%s0 + $0xac] sm:$0xf]
  %v62 = vld [vmem:[%s0 + $0xb0] sm:$0xf]
  %v63 = vld [vmem:[%s0 + $0xb4] sm:$0xf]
  %v64 = vld [vmem:[%s0 + $0xb8] sm:$0xf]
  %v65 = vld [vmem:[%s0 + $0xbc] sm:$0xf]
  %v66 = vld [vmem:[%s0 + $0xc0] sm:$0xf]
  %v67 = vld [vmem:[%s0 + $0xc4] sm:$0xf]
  %v68 = vld [vmem:[%s0 + $0xc8] sm:$0xf]
  %v69 = vld [vmem:[%s0 + $0xcc] sm:$0xf]
  %v70 = vld [vmem:[%s0 + $0xd0] sm:$0xf]
  %v71 = vld [vmem:[%s0 + $0xd4] sm:$0xf]
  %v72 = vld [vmem:[%s0 + $0xd8] sm:$0xf]
  %v73 = vld [vmem:[%s0 + $0xdc] sm:$0xf]
  %v74 = vld [vmem:[%s0 + $0xe0] sm:$0xf]
  %v75 = vld [vmem:[%s0 + $0xe4] sm:$0xf]
  %v76 = vld [vmem:[%s0 + $0xe8] sm:$0xf]
  %v77 = vld [vmem:[%s0 + $0xec] sm:$0xf]
  %v78 = vld [vmem:[%s0 + $0xf0] sm:$0xf]
  %v79 = vld [vmem:[%s0 + $0xf4] sm:$0xf]
  %v80 = vld [vmem:[%s0 + $0xf8] sm:$0xf]
  %v81 = vld [vmem:[%s0 + $0xfc] sm:$0xf]
  %v82 = vld [vmem:[%s1] sm:$0xf]
  %v83 = vld [vmem:[%s1 + $0x4] sm:$0xf]
  %v84 = vld [vmem:[%s1 + $0x8] sm:$0xf]
  %v85 = vld [vmem:[%s1 + $0xc] sm:$0xf]
  %v86 = vld [vmem:[%s1 + $0x10] sm:$0xf]
  %v87 = vld [vmem:[%s1 + $0x14] sm:$0xf]
  %v88 = vld [vmem:[%s1 + $0x18] sm:$0xf]
  %v89 = vld [vmem:[%s1 + $0x1c] sm:$0xf]
  %v154 = vunpack.c.l.b16 %v18
  %v155 = vunpack.c.l.b16 %v19
  %v156 = vunpack.c.l.b16 %v20
  %v157 = vunpack.c.l.b16 %v21
  %v158 = vunpack.c.l.b16 %v22
  %v159 = vunpack.c.l.b16 %v23
  %v160 = vunpack.c.l.b16 %v24
  %v161 = vunpack.c.l.b16 %v25
  %v162 = vunpack.c.l.b16 %v26
  %v163 = vunpack.c.l.b16 %v27
  %v164 = vunpack.c.l.b16 %v28
  %v165 = vunpack.c.l.b16 %v29
  %v166 = vunpack.c.l.b16 %v30
  %v167 = vunpack.c.l.b16 %v31
  %v168 = vunpack.c.l.b16 %v32
  %v169 = vunpack.c.l.b16 %v33
  %v170 = vunpack.c.l.b16 %v34
  %v171 = vunpack.c.l.b16 %v35
  %v172 = vunpack.c.l.b16 %v36
  %v173 = vunpack.c.l.b16 %v37
  %v174 = vunpack.c.l.b16 %v38
  %v175 = vunpack.c.l.b16 %v39
  %v176 = vunpack.c.l.b16 %v40
  %v177 = vunpack.c.l.b16 %v41
  %v178 = vunpack.c.l.b16 %v42
  %v179 = vunpack.c.l.b16 %v43
  %v180 = vunpack.c.l.b16 %v44
  %v181 = vunpack.c.l.b16 %v45
  %v182 = vunpack.c.l.b16 %v46
  %v183 = vunpack.c.l.b16 %v47
  %v184 = vunpack.c.l.b16 %v48
  %v185 = vunpack.c.l.b16 %v49
  %v186 = vunpack.c.l.b16 %v50
  %v187 = vunpack.c.l.b16 %v51
  %v188 = vunpack.c.l.b16 %v52
  %v189 = vunpack.c.l.b16 %v53
  %v190 = vunpack.c.l.b16 %v54
  %v191 = vunpack.c.l.b16 %v55
  %v192 = vunpack.c.l.b16 %v56
  %v193 = vunpack.c.l.b16 %v57
  %v194 = vunpack.c.l.b16 %v58
  %v195 = vunpack.c.l.b16 %v59
  %v196 = vunpack.c.l.b16 %v60
  %v197 = vunpack.c.l.b16 %v61
  %v198 = vunpack.c.l.b16 %v62
  %v199 = vunpack.c.l.b16 %v63
  %v200 = vunpack.c.l.b16 %v64
  %v201 = vunpack.c.l.b16 %v65
  %v202 = vunpack.c.l.b16 %v66
  %v203 = vunpack.c.l.b16 %v67
  %v204 = vunpack.c.l.b16 %v68
  %v205 = vunpack.c.l.b16 %v69
  %v206 = vunpack.c.l.b16 %v70
  %v207 = vunpack.c.l.b16 %v71
  %v208 = vunpack.c.l.b16 %v72
  %v209 = vunpack.c.l.b16 %v73
  %v210 = vunpack.c.l.b16 %v74
  %v211 = vunpack.c.l.b16 %v75
  %v212 = vunpack.c.l.b16 %v76
  %v213 = vunpack.c.l.b16 %v77
  %v214 = vunpack.c.l.b16 %v78
  %v215 = vunpack.c.l.b16 %v79
  %v216 = vunpack.c.l.b16 %v80
  %v217 = vunpack.c.l.b16 %v81
  %v218 = vpack.c.b16 %v155, %v154
  %v219 = vpack.c.b16 %v157, %v156
  %v220 = vpack.c.b16 %v159, %v158
  %v221 = vpack.c.b16 %v161, %v160
  %v222 = vpack.c.b16 %v163, %v162
  %v223 = vpack.c.b16 %v165, %v164
  %v224 = vpack.c.b16 %v167, %v166
  %v225 = vpack.c.b16 %v169, %v168
  %v226 = vpack.c.b16 %v171, %v170
  %v227 = vpack.c.b16 %v173, %v172
  %v228 = vpack.c.b16 %v175, %v174
  %v229 = vpack.c.b16 %v177, %v176
  %v230 = vpack.c.b16 %v179, %v178
  %v231 = vpack.c.b16 %v181, %v180
  %v232 = vpack.c.b16 %v183, %v182
  %v233 = vpack.c.b16 %v185, %v184
  %v234 = vpack.c.b16 %v187, %v186
  %v235 = vpack.c.b16 %v189, %v188
  %v236 = vpack.c.b16 %v191, %v190
  %v237 = vpack.c.b16 %v193, %v192
  %v238 = vpack.c.b16 %v195, %v194
  %v239 = vpack.c.b16 %v197, %v196
  %v240 = vpack.c.b16 %v199, %v198
  %v241 = vpack.c.b16 %v201, %v200
  %v242 = vpack.c.b16 %v203, %v202
  %v243 = vpack.c.b16 %v205, %v204
  %v244 = vpack.c.b16 %v207, %v206
  %v245 = vpack.c.b16 %v209, %v208
  %v246 = vpack.c.b16 %v211, %v210
  %v247 = vpack.c.b16 %v213, %v212
  %v248 = vpack.c.b16 %v215, %v214
  %v249 = vpack.c.b16 %v217, %v216
  %v258 = vunpack.c.l.b16 %v82
  %v259 = vunpack.c.l.b16 %v83
  %v260 = vunpack.c.l.b16 %v84
  %v261 = vunpack.c.l.b16 %v85
  %v262 = vunpack.c.l.b16 %v86
  %v263 = vunpack.c.l.b16 %v87
  %v264 = vunpack.c.l.b16 %v88
  %v265 = vunpack.c.l.b16 %v89
  %v266 = vpack.c.b16 %v259, %v258
  %v267 = vpack.c.b16 %v261, %v260
  %v268 = vpack.c.b16 %v263, %v262
  %v269 = vpack.c.b16 %v265, %v264
  %vm274 = vcmask 523264
  %v276 = vsel %vm274, %v218, 0
  %v279 = vsel %vm274, %v219, 0
  %v282 = vsel %vm274, %v220, 0
  %v285 = vsel %vm274, %v221, 0
  %v288 = vsel %vm274, %v222, 0
  %v291 = vsel %vm274, %v223, 0
  %v294 = vsel %vm274, %v224, 0
  %v297 = vsel %vm274, %v225, 0
  %v300 = vsel %vm274, %v226, 0
  %v303 = vsel %vm274, %v227, 0
  %v306 = vsel %vm274, %v228, 0
  %v309 = vsel %vm274, %v229, 0
  %v312 = vsel %vm274, %v230, 0
  %v315 = vsel %vm274, %v231, 0
  %v318 = vsel %vm274, %v232, 0
  %v321 = vsel %vm274, %v233, 0
  %v324 = vsel %vm274, %v234, 0
  %v327 = vsel %vm274, %v235, 0
  %v330 = vsel %vm274, %v236, 0
  %v333 = vsel %vm274, %v237, 0
  %v336 = vsel %vm274, %v238, 0
  %v339 = vsel %vm274, %v239, 0
  %v342 = vsel %vm274, %v240, 0
  %v345 = vsel %vm274, %v241, 0
  %v348 = vsel %vm274, %v242, 0
  %v351 = vsel %vm274, %v243, 0
  %v354 = vsel %vm274, %v244, 0
  %v357 = vsel %vm274, %v245, 0
  %v360 = vsel %vm274, %v246, 0
  %v363 = vsel %vm274, %v247, 0
  %v366 = vsel %vm274, %v248, 0
  %v369 = vsel %vm274, %v249, 0
  %371 = vmatpush.bf16.msra.mxu0 0
  %372 = vmatpush.bf16.msra.mxu0 0
  %373 = vmatpush.bf16.msra.mxu0 0
  %374 = vmatpush.bf16.msra.mxu0 0
  %375 = vmatpush.bf16.msra.mxu0 %v269
  %376 = vmatpush.bf16.msra.mxu0 %v268
  %377 = vmatpush.bf16.msra.mxu0 %v267
  %378 = vmatpush.bf16.msra.mxu0 %v266
  %379 = vmatmul.bf16.gmra.mxu0 %v276
  %v380 = vpop.f32.mrf.mxu0
  %v381 = vadd.f32 0.0, %v380
  %v382 = vpop.f32.mrf.mxu0
  %v383 = vadd.f32 0.0, %v382
  %384 = vmatmul.bf16.gmra.mxu0 %v279
  %v385 = vpop.f32.mrf.mxu0
  %v386 = vadd.f32 0.0, %v385
  %v387 = vpop.f32.mrf.mxu0
  %v388 = vadd.f32 0.0, %v387
  %389 = vmatmul.bf16.gmra.mxu0 %v282
  %v390 = vpop.f32.mrf.mxu0
  %v391 = vadd.f32 0.0, %v390
  %v392 = vpop.f32.mrf.mxu0
  %v393 = vadd.f32 0.0, %v392
  %394 = vmatmul.bf16.gmra.mxu0 %v285
  %v395 = vpop.f32.mrf.mxu0
  %v396 = vadd.f32 0.0, %v395
  %v397 = vpop.f32.mrf.mxu0
  %v398 = vadd.f32 0.0, %v397
  %399 = vmatmul.bf16.gmra.mxu0 %v288
  %v400 = vpop.f32.mrf.mxu0
  %v401 = vadd.f32 0.0, %v400
  %v402 = vpop.f32.mrf.mxu0
  %v403 = vadd.f32 0.0, %v402
  %404 = vmatmul.bf16.gmra.mxu0 %v291
  %v405 = vpop.f32.mrf.mxu0
  %v406 = vadd.f32 0.0, %v405
  %v407 = vpop.f32.mrf.mxu0
  %v408 = vadd.f32 0.0, %v407
  %409 = vmatmul.bf16.gmra.mxu0 %v294
  %v410 = vpop.f32.mrf.mxu0
  %v411 = vadd.f32 0.0, %v410
  %v412 = vpop.f32.mrf.mxu0
  %v413 = vadd.f32 0.0, %v412
  %414 = vmatmul.bf16.gmra.mxu0 %v297
  %v415 = vpop.f32.mrf.mxu0
  %v416 = vadd.f32 0.0, %v415
  %v417 = vpop.f32.mrf.mxu0
  %v418 = vadd.f32 0.0, %v417
  %419 = vmatmul.bf16.gmra.mxu0 %v300
  %v420 = vpop.f32.mrf.mxu0
  %v421 = vadd.f32 0.0, %v420
  %v422 = vpop.f32.mrf.mxu0
  %v423 = vadd.f32 0.0, %v422
  %424 = vmatmul.bf16.gmra.mxu0 %v303
  %v425 = vpop.f32.mrf.mxu0
  %v426 = vadd.f32 0.0, %v425
  %v427 = vpop.f32.mrf.mxu0
  %v428 = vadd.f32 0.0, %v427
  %429 = vmatmul.bf16.gmra.mxu0 %v306
  %v430 = vpop.f32.mrf.mxu0
  %v431 = vadd.f32 0.0, %v430
  %v432 = vpop.f32.mrf.mxu0
  %v433 = vadd.f32 0.0, %v432
  %434 = vmatmul.bf16.gmra.mxu0 %v309
  %v435 = vpop.f32.mrf.mxu0
  %v436 = vadd.f32 0.0, %v435
  %v437 = vpop.f32.mrf.mxu0
  %v438 = vadd.f32 0.0, %v437
  %439 = vmatmul.bf16.gmra.mxu0 %v312
  %v440 = vpop.f32.mrf.mxu0
  %v441 = vadd.f32 0.0, %v440
  %v442 = vpop.f32.mrf.mxu0
  %v443 = vadd.f32 0.0, %v442
  %444 = vmatmul.bf16.gmra.mxu0 %v315
  %v445 = vpop.f32.mrf.mxu0
  %v446 = vadd.f32 0.0, %v445
  %v447 = vpop.f32.mrf.mxu0
  %v448 = vadd.f32 0.0, %v447
  %449 = vmatmul.bf16.gmra.mxu0 %v318
  %v450 = vpop.f32.mrf.mxu0
  %v451 = vadd.f32 0.0, %v450
  %v452 = vpop.f32.mrf.mxu0
  %v453 = vadd.f32 0.0, %v452
  %454 = vmatmul.bf16.gmra.mxu0 %v321
  %v455 = vpop.f32.mrf.mxu0
  %v456 = vadd.f32 0.0, %v455
  %v457 = vpop.f32.mrf.mxu0
  %v458 = vadd.f32 0.0, %v457
  %459 = vmatmul.bf16.gmra.mxu0 %v324
  %v460 = vpop.f32.mrf.mxu0
  %v461 = vadd.f32 0.0, %v460
  %v462 = vpop.f32.mrf.mxu0
  %v463 = vadd.f32 0.0, %v462
  %464 = vmatmul.bf16.gmra.mxu0 %v327
  %v465 = vpop.f32.mrf.mxu0
  %v466 = vadd.f32 0.0, %v465
  %v467 = vpop.f32.mrf.mxu0
  %v468 = vadd.f32 0.0, %v467
  %469 = vmatmul.bf16.gmra.mxu0 %v330
  %v470 = vpop.f32.mrf.mxu0
  %v471 = vadd.f32 0.0, %v470
  %v472 = vpop.f32.mrf.mxu0
  %v473 = vadd.f32 0.0, %v472
  %474 = vmatmul.bf16.gmra.mxu0 %v333
  %v475 = vpop.f32.mrf.mxu0
  %v476 = vadd.f32 0.0, %v475
  %v477 = vpop.f32.mrf.mxu0
  %v478 = vadd.f32 0.0, %v477
  %479 = vmatmul.bf16.gmra.mxu0 %v336
  %v480 = vpop.f32.mrf.mxu0
  %v481 = vadd.f32 0.0, %v480
  %v482 = vpop.f32.mrf.mxu0
  %v483 = vadd.f32 0.0, %v482
  %484 = vmatmul.bf16.gmra.mxu0 %v339
  %v485 = vpop.f32.mrf.mxu0
  %v486 = vadd.f32 0.0, %v485
  %v487 = vpop.f32.mrf.mxu0
  %v488 = vadd.f32 0.0, %v487
  %489 = vmatmul.bf16.gmra.mxu0 %v342
  %v490 = vpop.f32.mrf.mxu0
  %v491 = vadd.f32 0.0, %v490
  %v492 = vpop.f32.mrf.mxu0
  %v493 = vadd.f32 0.0, %v492
  %494 = vmatmul.bf16.gmra.mxu0 %v345
  %v495 = vpop.f32.mrf.mxu0
  %v496 = vadd.f32 0.0, %v495
  %v497 = vpop.f32.mrf.mxu0
  %v498 = vadd.f32 0.0, %v497
  %499 = vmatmul.bf16.gmra.mxu0 %v348
  %v500 = vpop.f32.mrf.mxu0
  %v501 = vadd.f32 0.0, %v500
  %v502 = vpop.f32.mrf.mxu0
  %v503 = vadd.f32 0.0, %v502
  %504 = vmatmul.bf16.gmra.mxu0 %v351
  %v505 = vpop.f32.mrf.mxu0
  %v506 = vadd.f32 0.0, %v505
  %v507 = vpop.f32.mrf.mxu0
  %v508 = vadd.f32 0.0, %v507
  %509 = vmatmul.bf16.gmra.mxu0 %v354
  %v510 = vpop.f32.mrf.mxu0
  %v511 = vadd.f32 0.0, %v510
  %v512 = vpop.f32.mrf.mxu0
  %v513 = vadd.f32 0.0, %v512
  %514 = vmatmul.bf16.gmra.mxu0 %v357
  %v515 = vpop.f32.mrf.mxu0
  %v516 = vadd.f32 0.0, %v515
  %v517 = vpop.f32.mrf.mxu0
  %v518 = vadd.f32 0.0, %v517
  %519 = vmatmul.bf16.gmra.mxu0 %v360
  %v520 = vpop.f32.mrf.mxu0
  %v521 = vadd.f32 0.0, %v520
  %v522 = vpop.f32.mrf.mxu0
  %v523 = vadd.f32 0.0, %v522
  %524 = vmatmul.bf16.gmra.mxu0 %v363
  %v525 = vpop.f32.mrf.mxu0
  %v526 = vadd.f32 0.0, %v525
  %v527 = vpop.f32.mrf.mxu0
  %v528 = vadd.f32 0.0, %v527
  %529 = vmatmul.bf16.gmra.mxu0 %v366
  %v530 = vpop.f32.mrf.mxu0
  %v531 = vadd.f32 0.0, %v530
  %v532 = vpop.f32.mrf.mxu0
  %v533 = vadd.f32 0.0, %v532
  %534 = vmatmul.bf16.gmra.mxu0 %v369
  %v535 = vpop.f32.mrf.mxu0
  %v536 = vadd.f32 0.0, %v535
  %v537 = vpop.f32.mrf.mxu0
  %v538 = vadd.f32 0.0, %v537
  %539 = vdwg.mxu0
  %v540 = vld [vmem:[%s2] sm:$0x1]
  %v542 = vperm.slane %v540, 0
  %v544 = vmul.f32 %v381, %v542
  %v545 = vmul.f32 %v383, %v542
  %v546 = vmul.f32 %v386, %v542
  %v547 = vmul.f32 %v388, %v542
  %v548 = vmul.f32 %v391, %v542
  %v549 = vmul.f32 %v393, %v542
  %v550 = vmul.f32 %v396, %v542
  %v551 = vmul.f32 %v398, %v542
  %v552 = vmul.f32 %v401, %v542
  %v553 = vmul.f32 %v403, %v542
  %v554 = vmul.f32 %v406, %v542
  %v555 = vmul.f32 %v408, %v542
  %v556 = vmul.f32 %v411, %v542
  %v557 = vmul.f32 %v413, %v542
  %v558 = vmul.f32 %v416, %v542
  %v559 = vmul.f32 %v418, %v542
  %v560 = vmul.f32 %v421, %v542
  %v561 = vmul.f32 %v423, %v542
  %v562 = vmul.f32 %v426, %v542
  %v563 = vmul.f32 %v428, %v542
  %v564 = vmul.f32 %v431, %v542
  %v565 = vmul.f32 %v433, %v542
  %v566 = vmul.f32 %v436, %v542
  %v567 = vmul.f32 %v438, %v542
  %v568 = vmul.f32 %v441, %v542
  %v569 = vmul.f32 %v443, %v542
  %v570 = vmul.f32 %v446, %v542
  %v571 = vmul.f32 %v448, %v542
  %v572 = vmul.f32 %v451, %v542
  %v573 = vmul.f32 %v453, %v542
  %v574 = vmul.f32 %v456, %v542
  %v575 = vmul.f32 %v458, %v542
  %v576 = vmul.f32 %v461, %v542
  %v577 = vmul.f32 %v463, %v542
  %v578 = vmul.f32 %v466, %v542
  %v579 = vmul.f32 %v468, %v542
  %v580 = vmul.f32 %v471, %v542
  %v581 = vmul.f32 %v473, %v542
  %v582 = vmul.f32 %v476, %v542
  %v583 = vmul.f32 %v478, %v542
  %v584 = vmul.f32 %v481, %v542
  %v585 = vmul.f32 %v483, %v542
  %v586 = vmul.f32 %v486, %v542
  %v587 = vmul.f32 %v488, %v542
  %v588 = vmul.f32 %v491, %v542
  %v589 = vmul.f32 %v493, %v542
  %v590 = vmul.f32 %v496, %v542
  %v591 = vmul.f32 %v498, %v542
  %v592 = vmul.f32 %v501, %v542
  %v593 = vmul.f32 %v503, %v542
  %v594 = vmul.f32 %v506, %v542
  %v595 = vmul.f32 %v508, %v542
  %v596 = vmul.f32 %v511, %v542
  %v597 = vmul.f32 %v513, %v542
  %v598 = vmul.f32 %v516, %v542
  %v599 = vmul.f32 %v518, %v542
  %v600 = vmul.f32 %v521, %v542
  %v601 = vmul.f32 %v523, %v542
  %v602 = vmul.f32 %v526, %v542
  %v603 = vmul.f32 %v528, %v542
  %v604 = vmul.f32 %v531, %v542
  %v605 = vmul.f32 %v533, %v542
  %v606 = vmul.f32 %v536, %v542
  %v607 = vmul.f32 %v538, %v542
  %v608 = vld [vmem:[%s3] sm:$0x1]
  %v610 = vperm.slane %v608, 0
  %v612 = vadd.f32 %v544, %v610
  %v613 = vadd.f32 %v545, %v610
  %v614 = vadd.f32 %v546, %v610
  %v615 = vadd.f32 %v547, %v610
  %v616 = vadd.f32 %v548, %v610
  %v617 = vadd.f32 %v549, %v610
  %v618 = vadd.f32 %v550, %v610
  %v619 = vadd.f32 %v551, %v610
  %v620 = vadd.f32 %v552, %v610
  %v621 = vadd.f32 %v553, %v610
  %v622 = vadd.f32 %v554, %v610
  %v623 = vadd.f32 %v555, %v610
  %v624 = vadd.f32 %v556, %v610
  %v625 = vadd.f32 %v557, %v610
  %v626 = vadd.f32 %v558, %v610
  %v627 = vadd.f32 %v559, %v610
  %v628 = vadd.f32 %v560, %v610
  %v629 = vadd.f32 %v561, %v610
  %v630 = vadd.f32 %v562, %v610
  %v631 = vadd.f32 %v563, %v610
  %v632 = vadd.f32 %v564, %v610
  %v633 = vadd.f32 %v565, %v610
  %v634 = vadd.f32 %v566, %v610
  %v635 = vadd.f32 %v567, %v610
  %v636 = vadd.f32 %v568, %v610
  %v637 = vadd.f32 %v569, %v610
  %v638 = vadd.f32 %v570, %v610
  %v639 = vadd.f32 %v571, %v610
  %v640 = vadd.f32 %v572, %v610
  %v641 = vadd.f32 %v573, %v610
  %v642 = vadd.f32 %v574, %v610
  %v643 = vadd.f32 %v575, %v610
  %v644 = vadd.f32 %v576, %v610
  %v645 = vadd.f32 %v577, %v610
  %v646 = vadd.f32 %v578, %v610
  %v647 = vadd.f32 %v579, %v610
  %v648 = vadd.f32 %v580, %v610
  %v649 = vadd.f32 %v581, %v610
  %v650 = vadd.f32 %v582, %v610
  %v651 = vadd.f32 %v583, %v610
  %v652 = vadd.f32 %v584, %v610
  %v653 = vadd.f32 %v585, %v610
  %v654 = vadd.f32 %v586, %v610
  %v655 = vadd.f32 %v587, %v610
  %v656 = vadd.f32 %v588, %v610
  %v657 = vadd.f32 %v589, %v610
  %v658 = vadd.f32 %v590, %v610
  %v659 = vadd.f32 %v591, %v610
  %v660 = vadd.f32 %v592, %v610
  %v661 = vadd.f32 %v593, %v610
  %v662 = vadd.f32 %v594, %v610
  %v663 = vadd.f32 %v595, %v610
  %v664 = vadd.f32 %v596, %v610
  %v665 = vadd.f32 %v597, %v610
  %v666 = vadd.f32 %v598, %v610
  %v667 = vadd.f32 %v599, %v610
  %v668 = vadd.f32 %v600, %v610
  %v669 = vadd.f32 %v601, %v610
  %v670 = vadd.f32 %v602, %v610
  %v671 = vadd.f32 %v603, %v610
  %v672 = vadd.f32 %v604, %v610
  %v673 = vadd.f32 %v605, %v610
  %v674 = vadd.f32 %v606, %v610
  %v675 = vadd.f32 %v607, %v610
  %v676 = vmax.f32 %v612, 0.0
  %v677 = vmax.f32 %v613, 0.0
  %v678 = vmax.f32 %v614, 0.0
  %v679 = vmax.f32 %v615, 0.0
  %v680 = vmax.f32 %v616, 0.0
  %v681 = vmax.f32 %v617, 0.0
  %v682 = vmax.f32 %v618, 0.0
  %v683 = vmax.f32 %v619, 0.0
  %v684 = vmax.f32 %v620, 0.0
  %v685 = vmax.f32 %v621, 0.0
  %v686 = vmax.f32 %v622, 0.0
  %v687 = vmax.f32 %v623, 0.0
  %v688 = vmax.f32 %v624, 0.0
  %v689 = vmax.f32 %v625, 0.0
  %v690 = vmax.f32 %v626, 0.0
  %v691 = vmax.f32 %v627, 0.0
  %v692 = vmax.f32 %v628, 0.0
  %v693 = vmax.f32 %v629, 0.0
  %v694 = vmax.f32 %v630, 0.0
  %v695 = vmax.f32 %v631, 0.0
  %v696 = vmax.f32 %v632, 0.0
  %v697 = vmax.f32 %v633, 0.0
  %v698 = vmax.f32 %v634, 0.0
  %v699 = vmax.f32 %v635, 0.0
  %v700 = vmax.f32 %v636, 0.0
  %v701 = vmax.f32 %v637, 0.0
  %v702 = vmax.f32 %v638, 0.0
  %v703 = vmax.f32 %v639, 0.0
  %v704 = vmax.f32 %v640, 0.0
  %v705 = vmax.f32 %v641, 0.0
  %v706 = vmax.f32 %v642, 0.0
  %v707 = vmax.f32 %v643, 0.0
  %v708 = vmax.f32 %v644, 0.0
  %v709 = vmax.f32 %v645, 0.0
  %v710 = vmax.f32 %v646, 0.0
  %v711 = vmax.f32 %v647, 0.0
  %v712 = vmax.f32 %v648, 0.0
  %v713 = vmax.f32 %v649, 0.0
  %v714 = vmax.f32 %v650, 0.0
  %v715 = vmax.f32 %v651, 0.0
  %v716 = vmax.f32 %v652, 0.0
  %v717 = vmax.f32 %v653, 0.0
  %v718 = vmax.f32 %v654, 0.0
  %v719 = vmax.f32 %v655, 0.0
  %v720 = vmax.f32 %v656, 0.0
  %v721 = vmax.f32 %v657, 0.0
  %v722 = vmax.f32 %v658, 0.0
  %v723 = vmax.f32 %v659, 0.0
  %v724 = vmax.f32 %v660, 0.0
  %v725 = vmax.f32 %v661, 0.0
  %v726 = vmax.f32 %v662, 0.0
  %v727 = vmax.f32 %v663, 0.0
  %v728 = vmax.f32 %v664, 0.0
  %v729 = vmax.f32 %v665, 0.0
  %v730 = vmax.f32 %v666, 0.0
  %v731 = vmax.f32 %v667, 0.0
  %v732 = vmax.f32 %v668, 0.0
  %v733 = vmax.f32 %v669, 0.0
  %v734 = vmax.f32 %v670, 0.0
  %v735 = vmax.f32 %v671, 0.0
  %v736 = vmax.f32 %v672, 0.0
  %v737 = vmax.f32 %v673, 0.0
  %v738 = vmax.f32 %v674, 0.0
  %v739 = vmax.f32 %v675, 0.0
  %740 = vst [vmem:[%s4] sm:$0xff] %v676
  %741 = vst [vmem:[%s4 + $0x8] sm:$0xff] %v677
  %742 = vst [vmem:[%s4 + $0x10] sm:$0xff] %v678
  %743 = vst [vmem:[%s4 + $0x18] sm:$0xff] %v679
  %744 = vst [vmem:[%s4 + $0x20] sm:$0xff] %v680
  %745 = vst [vmem:[%s4 + $0x28] sm:$0xff] %v681
  %746 = vst [vmem:[%s4 + $0x30] sm:$0xff] %v682
  %747 = vst [vmem:[%s4 + $0x38] sm:$0xff] %v683
  %748 = vst [vmem:[%s4 + $0x40] sm:$0xff] %v684
  %749 = vst [vmem:[%s4 + $0x48] sm:$0xff] %v685
  %750 = vst [vmem:[%s4 + $0x50] sm:$0xff] %v686
  %751 = vst [vmem:[%s4 + $0x58] sm:$0xff] %v687
  %752 = vst [vmem:[%s4 + $0x60] sm:$0xff] %v688
  %753 = vst [vmem:[%s4 + $0x68] sm:$0xff] %v689
  %754 = vst [vmem:[%s4 + $0x70] sm:$0xff] %v690
  %755 = vst [vmem:[%s4 + $0x78] sm:$0xff] %v691
  %756 = vst [vmem:[%s4 + $0x80] sm:$0xff] %v692
  %757 = vst [vmem:[%s4 + $0x88] sm:$0xff] %v693
  %758 = vst [vmem:[%s4 + $0x90] sm:$0xff] %v694
  %759 = vst [vmem:[%s4 + $0x98] sm:$0xff] %v695
  %760 = vst [vmem:[%s4 + $0xa0] sm:$0xff] %v696
  %761 = vst [vmem:[%s4 + $0xa8] sm:$0xff] %v697
  %762 = vst [vmem:[%s4 + $0xb0] sm:$0xff] %v698
  %763 = vst [vmem:[%s4 + $0xb8] sm:$0xff] %v699
  %764 = vst [vmem:[%s4 + $0xc0] sm:$0xff] %v700
  %765 = vst [vmem:[%s4 + $0xc8] sm:$0xff] %v701
  %766 = vst [vmem:[%s4 + $0xd0] sm:$0xff] %v702
  %767 = vst [vmem:[%s4 + $0xd8] sm:$0xff] %v703
  %768 = vst [vmem:[%s4 + $0xe0] sm:$0xff] %v704
  %769 = vst [vmem:[%s4 + $0xe8] sm:$0xff] %v705
  %770 = vst [vmem:[%s4 + $0xf0] sm:$0xff] %v706
  %771 = vst [vmem:[%s4 + $0xf8] sm:$0xff] %v707
  %772 = vst [vmem:[%s4 + $0x100] sm:$0xff] %v708
  %773 = vst [vmem:[%s4 + $0x108] sm:$0xff] %v709
  %774 = vst [vmem:[%s4 + $0x110] sm:$0xff] %v710
  %775 = vst [vmem:[%s4 + $0x118] sm:$0xff] %v711
  %776 = vst [vmem:[%s4 + $0x120] sm:$0xff] %v712
  %777 = vst [vmem:[%s4 + $0x128] sm:$0xff] %v713
  %778 = vst [vmem:[%s4 + $0x130] sm:$0xff] %v714
  %779 = vst [vmem:[%s4 + $0x138] sm:$0xff] %v715
  %780 = vst [vmem:[%s4 + $0x140] sm:$0xff] %v716
  %781 = vst [vmem:[%s4 + $0x148] sm:$0xff] %v717
  %782 = vst [vmem:[%s4 + $0x150] sm:$0xff] %v718
  %783 = vst [vmem:[%s4 + $0x158] sm:$0xff] %v719
  %784 = vst [vmem:[%s4 + $0x160] sm:$0xff] %v720
  %785 = vst [vmem:[%s4 + $0x168] sm:$0xff] %v721
  %786 = vst [vmem:[%s4 + $0x170] sm:$0xff] %v722
  %787 = vst [vmem:[%s4 + $0x178] sm:$0xff] %v723
  %788 = vst [vmem:[%s4 + $0x180] sm:$0xff] %v724
  %789 = vst [vmem:[%s4 + $0x188] sm:$0xff] %v725
  %790 = vst [vmem:[%s4 + $0x190] sm:$0xff] %v726
  %791 = vst [vmem:[%s4 + $0x198] sm:$0xff] %v727
  %792 = vst [vmem:[%s4 + $0x1a0] sm:$0xff] %v728
  %793 = vst [vmem:[%s4 + $0x1a8] sm:$0xff] %v729
  %794 = vst [vmem:[%s4 + $0x1b0] sm:$0xff] %v730
  %795 = vst [vmem:[%s4 + $0x1b8] sm:$0xff] %v731
  %796 = vst [vmem:[%s4 + $0x1c0] sm:$0xff] %v732
  %797 = vst [vmem:[%s4 + $0x1c8] sm:$0xff] %v733
  %798 = vst [vmem:[%s4 + $0x1d0] sm:$0xff] %v734
  %799 = vst [vmem:[%s4 + $0x1d8] sm:$0xff] %v735
  %800 = vst [vmem:[%s4 + $0x1e0] sm:$0xff] %v736
  %801 = vst [vmem:[%s4 + $0x1e8] sm:$0xff] %v737
  %802 = vst [vmem:[%s4 + $0x1f0] sm:$0xff] %v738
  %803 = vst [vmem:[%s4 + $0x1f8] sm:$0xff] %v739
  // Predicated region
  $region18: #{fractionally_strided_conv_block.3} parent=0 // pred_check
    _
  $region19: #{fractionally_strided_conv_block.3} parent=0 // pred_check_branch
    %805 = sbr.rel (0) target = $region21
  $region20: #{fractionally_strided_conv_block.3} parent=0 // pred_region
    _
  $region21: #{fractionally_strided_conv_block.3} parent=0 // pred_fallthru
    _
  // Predicated region
  $region22: #{fractionally_strided_conv_block.3} parent=0 // pred_check
    _
  $region23: #{fractionally_strided_conv_block.3} parent=0 // pred_check_branch
    %807 = sbr.rel (0) target = $region25
  $region24: #{fractionally_strided_conv_block.3} parent=0 // pred_region
    _
  $region25: #{fractionally_strided_conv_block.3} parent=0 // pred_fallthru
    _

</llo_original>
